<compile_context>
chip_gen: v7x
topology: tpu7x:2x2x1
jax: 0.10.0
libtpu: 0.0.40
codegen_flags: <defaults>
</compile_context>

<pallas_src>
import numpy as np

import jax
import jax.numpy as jnp
from jax.experimental import pallas as pl
from jax.experimental.pallas import tpu as pltpu


# ------------------------------ helpers ------------------------------

def _pick_row_tile(R, tm_max=1024, min_tiles=2):
    """Pick a row tile that (a) is a multiple of 16 (bf16 sublane packing),
    (b) divides R whenever possible (no pad / slice copies, no overhang
    blocks), and (c) leaves >= min_tiles row tiles so the 'parallel' grid axis
    feeds both v7x TensorCores."""
    if R <= 16:
        return R                       # single full-extent block
    tm_max = min(tm_max, R)
    if R // tm_max < min_tiles:        # ensure >=2 parallel row tiles
        tm_max = max(16, R // min_tiles)
    tm_max = max(16, (tm_max // 16) * 16)
    t = tm_max
    while t >= 16:                     # largest multiple of 16 that divides R
        if R % t == 0:
            return t
        t -= 16
    # No divisor found: use tm_max with edge-overhang blocks.  Tail rows then
    # contain garbage inside the kernel, but stores are masked and no
    # reduction crosses the row axis, so results are unaffected.
    return tm_max


# --------------------------- Pallas kernel ---------------------------
#
# Fused src/token path across all layers.
#   grid = (num_row_tiles, num_layers)   rows: "parallel", layers: "arbitrary"
# per-layer math (synthetic stand-in layer, see class below):
#   src <- src + relu((src + pos + ref_x*Wref[l,0] + ref_y*Wref[l,1]) @ W[l] + b[l])

def _fused_src_kernel(x_ref, pos_ref, ref_ref, wr_ref, w_ref, b_ref,
                      o_ref, acc_ref):
    l = pl.program_id(1)

    # At the first layer of each row tile, load the input tile into the
    # resident f32 accumulator (x/pos/ref2d blocks only depend on the row-tile
    # index, so Pallas keeps them in VMEM across the whole layer loop).
    @pl.when(l == 0)
    def _():
        acc_ref[...] = x_ref[...].astype(jnp.float32)

    x = acc_ref[...]                                        # (tm, C) f32 carry
    r = ref_ref[...]                                        # (tm, 2) f32
    wr = wr_ref[l]                                          # (2, C)  f32 (resident)
    b = b_ref[l]                                            # (1, C)  f32 (resident)

    # rank-2 refpoint projection as two VPU broadcast-FMAs (no K=2 MXU pass).
    # (lane-sparse ref2d broadcast left as-is per review: XLU has slack here.)
    h = (x + pos_ref[...].astype(jnp.float32)
         + r[:, 0:1] * wr[0:1, :] + r[:, 1:2] * wr[1:2, :])
    y = jnp.dot(h.astype(w_ref.dtype), w_ref[l],            # W stack resident in VMEM
                preferred_element_type=jnp.float32) + b
    new_x = x + jnp.maximum(y, 0.0)
    acc_ref[...] = new_x                                     # carry to next layer
    o_ref[...] = new_x.astype(o_ref.dtype)                   # this layer's slot


def _fused_src_layers(x, pos, ref2d, wr_stack, w_stack, b_stack, *,
                      stream_dtype=jnp.bfloat16, out_dtype=jnp.bfloat16,
                      tm=1024, vmem_limit_bytes=None):
    """All layers of the src update in a single pallas_call.

    x, pos   : (R, C) f32       ref2d   : (R, 2) f32
    wr_stack : (L, 2, C) f32    w_stack : (L, C, C)    b_stack : (L, 1, C) f32
    returns  : (L, R, C) out_dtype
    """
    R, C = x.shape
    L = w_stack.shape[0]
    tm = _pick_row_tile(R, tm_max=tm)

    # bf16 streaming (default on all generations): halves HBM read traffic of
    # x/pos/W and uses the native bf16 MXU; residual / relu / accumulation stay
    # f32 in the VMEM scratch (so v5e's lack of bf16 VPU is irrelevant).
    xs = x.astype(stream_dtype)
    ps = pos.astype(stream_dtype)
    ws = w_stack.astype(stream_dtype)

    cp_kwargs = dict(dimension_semantics=("parallel", "arbitrary"))
    if vmem_limit_bytes is not None:
        cp_kwargs["vmem_limit_bytes"] = vmem_limit_bytes

    out = pl.pallas_call(
        _fused_src_kernel,
        out_shape=jax.ShapeDtypeStruct((L, R, C), out_dtype),
        grid=(pl.cdiv(R, tm), L),
        in_specs=[
            pl.BlockSpec((tm, C), lambda i, l: (i, 0)),        # x   (resident over l)
            pl.BlockSpec((tm, C), lambda i, l: (i, 0)),        # pos (resident over l)
            pl.BlockSpec((tm, 2), lambda i, l: (i, 0)),        # ref2d (resident over l)
            # Full weight stacks, constant index_map -> VMEM-resident, DMA'd once.
            pl.BlockSpec((L, 2, C), lambda i, l: (0, 0, 0)),   # Wref stack
            pl.BlockSpec((L, C, C), lambda i, l: (0, 0, 0)),   # W stack
            pl.BlockSpec((L, 1, C), lambda i, l: (0, 0, 0)),   # b stack
        ],
        # each (layer, row-tile) writes its own slot of the stacked output:
        # no post-hoc concatenate, no pad/slice copies.
        out_specs=pl.BlockSpec((None, tm, C), lambda i, l: (l, i, 0)),
        scratch_shapes=[pltpu.VMEM((tm, C), jnp.float32)],
        compiler_params=pltpu.CompilerParams(**cp_kwargs),
    )(xs, ps, ref2d, wr_stack, ws, b_stack)

    return out


# ----------------------- reference points (XLA) -----------------------

def _build_refpoint_tables(spatial_shapes):
    base_list, dims_list, lvl_list = [], [], []
    for lvl, (H, W) in enumerate(spatial_shapes):
        ys, xs = np.meshgrid(np.linspace(0.5, H - 0.5, H, dtype=np.float32),
                             np.linspace(0.5, W - 0.5, W, dtype=np.float32),
                             indexing="ij")
        base_list.append(np.stack([xs.reshape(-1), ys.reshape(-1)], -1))   # (HW, 2)
        dims_list.append(np.broadcast_to(np.array([W, H], np.float32), (H * W, 2)))
        lvl_list.append(np.full(H * W, lvl, np.int32))
    base = np.concatenate(base_list, 0).astype(np.float32)    # (S, 2) [x, y]
    dims = np.concatenate(dims_list, 0).astype(np.float32)    # (S, 2) [W, H]
    lvl = np.concatenate(lvl_list, 0).astype(np.int32)        # (S,)
    return base, dims, lvl


def get_reference_points_xla(spatial_shapes, valid_ratios):
    """get_reference_points, computed in XLA directly in (B, S, L, 2) layout
    (tiny divide + broadcast — a pallas_call + transpose here is pure overhead)."""
    base_np, dims_np, lvl_np = _build_refpoint_tables(spatial_shapes)
    base = jnp.asarray(base_np)                      # (S, 2)
    dims = jnp.asarray(dims_np)                      # (S, 2)
    vr_g = valid_ratios[:, jnp.asarray(lvl_np), :]   # (B, S, 2)
    norm = base[None] / (vr_g * dims[None])          # (B, S, 2)
    return norm[:, :, None, :] * valid_ratios[:, None, :, :]   # (B, S, L, 2)


def get_reference_points_looped(spatial_shapes, valid_ratios):
    """Direct per-level mirror of the PyTorch code (validation only)."""
    ref_list = []
    for lvl, (H, W) in enumerate(spatial_shapes):
        ref_y, ref_x = jnp.meshgrid(jnp.linspace(0.5, H - 0.5, H),
                                    jnp.linspace(0.5, W - 0.5, W), indexing="ij")
        ref_y = ref_y.reshape(-1)[None] / (valid_ratios[:, None, lvl, 1] * H)
        ref_x = ref_x.reshape(-1)[None] / (valid_ratios[:, None, lvl, 0] * W)
        ref_list.append(jnp.stack((ref_x, ref_y), -1))
    rp = jnp.concatenate(ref_list, 1)
    return rp[:, :, None] * valid_ratios[:, None]


# --------------------------- query path (XLA) ---------------------------

def _query_layers_xla(query, query_embed, wq_stack, bq_stack, wg_stack, bg_stack):
    """Query / gate path.  Only B*Q rows of work and a 3-wide gate output —
    plain XLA is cheaper than a dedicated pallas_call with lane-sparse stores."""
    q = query
    gates = None
    hp = jax.lax.Precision.HIGHEST
    for l in range(wq_stack.shape[0]):
        h = q + query_embed
        q = q + jax.nn.relu(jnp.dot(h, wq_stack[l], precision=hp) + bq_stack[l])
        gates = jax.nn.sigmoid(jnp.dot(q, wg_stack[l], precision=hp) + bg_stack[l])
    return q, gates


# ----------------------------- module classes -----------------------------

class SyntheticEncoderLayerWithQuery:
    """Stand-in for the injected M3Net encoder layer
    (MSDeformAttnTransformerEncoderLayerWithQuery).  Call signature and output
    structure match; the heavy src-path matmul runs in the fused Pallas kernel.
    # TODO(synk): real layer = multi-scale deformable attention (gather-heavy
    # sampling) + LayerNorm / d_ffn FFN stacks / TCSLayer gating; padding_mask,
    # spatial_mask and query_index are accepted by the encoder but unused here.
    """

    def __init__(self, d_model, key):
        k = jax.random.split(key, 7)
        s = 0.05
        self.w_ref = s * jax.random.normal(k[0], (2, d_model), jnp.float32)
        self.w_src = s * jax.random.normal(k[1], (d_model, d_model), jnp.float32)
        self.b_src = s * jax.random.normal(k[2], (1, d_model), jnp.float32)
        self.w_q = s * jax.random.normal(k[3], (d_model, d_model), jnp.float32)
        self.b_q = s * jax.random.normal(k[4], (1, d_model), jnp.float32)
        self.w_g = s * jax.random.normal(k[5], (d_model, 3), jnp.float32)
        self.b_g = s * jax.random.normal(k[6], (1, 3), jnp.float32)

    def clone(self):
        new = object.__new__(SyntheticEncoderLayerWithQuery)
        new.__dict__.update(self.__dict__)   # params are immutable jax arrays
        return new

    def reference_call(self, query, query_embed, output, pos, reference_points):
        """Pure-JAX unfused per-layer update (validation reference)."""
        B, S, C = output.shape
        hp = jax.lax.Precision.HIGHEST
        ref2d = reference_points[:, :S, 0, :]
        h = output + pos + jnp.dot(ref2d, self.w_ref, precision=hp)
        new_out = output + jax.nn.relu(
            jnp.dot(h, self.w_src, precision=hp) + self.b_src)
        hq = query + query_embed
        qn = query + jax.nn.relu(jnp.dot(hq, self.w_q, precision=hp) + self.b_q)
        gates = jax.nn.sigmoid(jnp.dot(qn, self.w_g, precision=hp) + self.b_g)
        return (qn, new_out, gates[..., 0:1], gates[..., 1:2], gates[..., 2:3])


def _get_clones(module, N):
    # nn._get_clones deep-copies one layer -> all clones share identical initial
    # weights (params are immutable jax arrays, so sharing == copying).
    return [module.clone() for _ in range(N)]


class MSEncoderWithQuery:
    def __init__(self, encoder_layer, num_layers):
        self.layers = _get_clones(encoder_layer, num_layers)
        self.num_layers = num_layers
        # Stack per-layer params once so the whole layer loop can run inside a
        # single pallas_call with the stacks VMEM-resident.
        self._wr = jnp.stack([ly.w_ref for ly in self.layers])   # (L, 2, C)
        self._w = jnp.stack([ly.w_src for ly in self.layers])    # (L, C, C)
        self._b = jnp.stack([ly.b_src for ly in self.layers])    # (L, 1, C)
        self._wq = jnp.stack([ly.w_q for ly in self.layers])     # (L, C, C)
        self._bq = jnp.stack([ly.b_q for ly in self.layers])     # (L, 1, C)
        self._wg = jnp.stack([ly.w_g for ly in self.layers])     # (L, C, 3)
        self._bg = jnp.stack([ly.b_g for ly in self.layers])     # (L, 1, 3)

    @staticmethod
    def get_reference_points(spatial_shapes, valid_ratios):
        return get_reference_points_xla(spatial_shapes, valid_ratios)

    def forward(self, src, spatial_shapes, level_start_index, valid_ratios,
                pos=None, padding_mask=None, spatial_mask=None,
                query_refpoint=None, query=None, query_embed=None,
                query_index=None, stream_dtype=jnp.bfloat16,
                out_dtype=jnp.bfloat16, row_tile=1024, vmem_limit_bytes=None):
        B, S, C = src.shape
        if pos is None:
            pos = jnp.zeros_like(src)
        reference_points = self.get_reference_points(spatial_shapes, valid_ratios)
        if query_refpoint is not None:
            # torch.cat([reference_points, query_refpoint.unsqueeze(2) / 180], 1)
            reference_points = jnp.concatenate(
                [reference_points, query_refpoint[:, :, None, :] / 180.0], axis=1)
        ref2d = reference_points[:, :S, 0, :]   # level-0 refpoints of the src tokens

        # Fused Pallas path: all layers, outputs written directly into their
        # stacked slots (== torch.cat(output_list, dim=0) after reshape).
        outs = _fused_src_layers(
            src.reshape(B * S, C), pos.reshape(B * S, C), ref2d.reshape(B * S, 2),
            self._wr, self._w, self._b,
            stream_dtype=stream_dtype, out_dtype=out_dtype,
            tm=row_tile, vmem_limit_bytes=vmem_limit_bytes)       # (L, B*S, C)
        outs = outs.reshape(self.num_layers, B, S, C)

        # Tiny query / gate path in plain XLA.
        q, gates = _query_layers_xla(query, query_embed,
                                     self._wq, self._bq, self._wg, self._bg)
        gate, gate_det, gate_seg = gates[..., 0:1], gates[..., 1:2], gates[..., 2:3]
        return (q, outs.reshape(self.num_layers * B, S, C),
                gate, gate_det, gate_seg)

    def forward_reference(self, src, spatial_shapes, level_start_index,
                          valid_ratios, pos=None, padding_mask=None,
                          spatial_mask=None, query_refpoint=None, query=None,
                          query_embed=None, query_index=None):
        """Unfused pure-JAX mirror of the original per-layer loop (validation)."""
        if pos is None:
            pos = jnp.zeros_like(src)
        output = src
        reference_points = get_reference_points_looped(spatial_shapes, valid_ratios)
        if query_refpoint is not None:
            reference_points = jnp.concatenate(
                [reference_points, query_refpoint[:, :, None, :] / 180.0], axis=1)
        output_list = []
        q = query
        gate = gate_det = gate_seg = None
        for layer in self.layers:
            q, output, gate, gate_det, gate_seg = layer.reference_call(
                q, query_embed, output, pos, reference_points)
            output_list.append(output)
        return (q, jnp.concatenate(output_list, axis=0), gate, gate_det, gate_seg)


# ----------------------------- demo -----------------------------

if __name__ == "__main__":
    key = jax.random.PRNGKey(0)
    # d_model is 256 in production; 128 keeps the demo small while staying
    # lane-dense (last dim >= 128).
    B, C, Q, num_layers = 2, 128, 8, 2
    spatial_shapes = ((16, 16), (8, 8))
    S = sum(h * w for h, w in spatial_shapes)          # 320 -> R = B*S = 640
    level_start_index = jnp.asarray(
        np.cumsum([0] + [h * w for h, w in spatial_shapes])[:-1], jnp.int32)

    ks = jax.random.split(key, 8)
    src = jax.random.normal(ks[0], (B, S, C), jnp.float32)
    pos = jax.random.normal(ks[1], (B, S, C), jnp.float32)
    valid_ratios = jax.random.uniform(ks[2], (B, len(spatial_shapes), 2),
                                      jnp.float32, 0.6, 1.0)
    query = jax.random.normal(ks[3], (B, Q, C), jnp.float32)
    query_embed = jax.random.normal(ks[4], (B, Q, C), jnp.float32)

    layer = SyntheticEncoderLayerWithQuery(C, jax.random.PRNGKey(42))
    enc = MSEncoderWithQuery(layer, num_layers)

    # --- unfused pure-JAX mirror of the layer loop (validation reference) ---
    q_ref, out_ref, g_ref, gd_ref, gs_ref = enc.forward_reference(
        src, spatial_shapes, level_start_index, valid_ratios,
        pos=pos, query=query, query_embed=query_embed)

    # --- fused Pallas forward, default (bf16 streams + bf16 stacked output) ---
    q_out, outputs, gate, gate_det, gate_seg = enc.forward(
        src, spatial_shapes, level_start_index, valid_ratios,
        pos=pos, query=query, query_embed=query_embed)
    jax.block_until_ready((q_out, outputs, gate, gate_det, gate_seg))

    assert q_out.shape == (B, Q, C)
    assert outputs.shape == (num_layers * B, S, C)
    assert gate.shape == gate_det.shape == gate_seg.shape == (B, Q, 1)
    assert jnp.allclose(outputs.astype(jnp.float32), out_ref, rtol=5e-2, atol=0.25)
    assert jnp.allclose(q_out, q_ref, rtol=1e-4, atol=1e-4)
    assert jnp.allclose(gate, g_ref, rtol=1e-4, atol=1e-4)
    assert jnp.allclose(gate_det, gd_ref, rtol=1e-4, atol=1e-4)
    assert jnp.allclose(gate_seg, gs_ref, rtol=1e-4, atol=1e-4)

    # --- f32 streaming / f32 output path (tighter parity check) ---
    q_f32, out_f32, *_ = enc.forward(
        src, spatial_shapes, level_start_index, valid_ratios,
        pos=pos, query=query, query_embed=query_embed,
        stream_dtype=jnp.float32, out_dtype=jnp.float32)
    jax.block_until_ready(out_f32)
    assert out_f32.dtype == jnp.float32
    assert jnp.allclose(out_f32, out_ref, rtol=1e-2, atol=1e-2)

    # --- reference points: table-based XLA vs per-level mirror ---
    rp = enc.get_reference_points(spatial_shapes, valid_ratios)
    rp_loop = get_reference_points_looped(spatial_shapes, valid_ratios)
    assert rp.shape == (B, S, len(spatial_shapes), 2)
    assert jnp.allclose(rp, rp_loop, rtol=1e-5, atol=1e-5)

    # --- query_refpoint concat path (single level, as torch.cat requires) ---
    spatial_shapes1 = ((8, 8),)
    S1 = 64
    src1 = jax.random.normal(ks[5], (B, S1, C), jnp.float32)
    pos1 = jax.random.normal(ks[6], (B, S1, C), jnp.float32)
    vr1 = jnp.ones((B, 1, 2), jnp.float32)
    qrp = jax.random.uniform(ks[7], (B, Q, 2), jnp.float32, 0.0, 180.0)
    out2 = enc.forward(src1, spatial_shapes1, jnp.asarray([0], jnp.int32), vr1,
                       pos=pos1, query_refpoint=qrp, query=query,
                       query_embed=query_embed)
    jax.block_until_ready(out2)
    assert out2[1].shape == (num_layers * B, S1, C)

    print("KERNEL_OK")
</pallas_src>

<mosaic_0001>
module attributes {stable_mosaic.version = 11 : i64} {
  func.func @_fused_src_kernel(%arg0: i32, %arg1: i32, %arg2: memref<320x128xbf16, #tpu.memory_space<vmem>>, %arg3: memref<320x128xbf16, #tpu.memory_space<vmem>>, %arg4: memref<320x2xf32, #tpu.memory_space<vmem>>, %arg5: memref<2x2x128xf32, #tpu.memory_space<vmem>>, %arg6: memref<2x128x128xbf16, #tpu.memory_space<vmem>>, %arg7: memref<2x1x128xf32, #tpu.memory_space<vmem>>, %arg8: memref<1x320x128xbf16, #tpu.memory_space<vmem>>, %arg9: memref<320x128xf32, #tpu.memory_space<vmem>>) attributes {dimension_semantics = [#tpu.dimension_semantics<parallel>, #tpu.dimension_semantics<arbitrary>], iteration_bounds = array<i64: 2, 2>, scalar_prefetch = 0 : i64, scratch_operands = 1 : i64, tpu.core_type = #tpu.core_type<tc>, window_params = [{transform_indices = @transform_0, window_bounds = array<i64: 320, 128>}, {transform_indices = @transform_1, window_bounds = array<i64: 320, 128>}, {transform_indices = @transform_2, window_bounds = array<i64: 320, 2>}, {pipeline_mode = #tpu.pipeline_mode<synchronous>, transform_indices = @transform_3, window_bounds = array<i64: 2, 2, 128>}, {pipeline_mode = #tpu.pipeline_mode<synchronous>, transform_indices = @transform_4, window_bounds = array<i64: 2, 128, 128>}, {pipeline_mode = #tpu.pipeline_mode<synchronous>, transform_indices = @transform_5, window_bounds = array<i64: 2, 1, 128>}, {transform_indices = @transform_6, window_bounds = array<i64: 1, 320, 128>}]} {
    %c0_i32 = arith.constant 0 : i32
    %0 = arith.cmpi eq, %arg1, %c0_i32 : i32
    %1 = arith.extui %0 : i1 to i32
    %c0_i32_0 = arith.constant 0 : i32
    %2 = arith.cmpi ne, %1, %c0_i32_0 : i32
    scf.if %2 {
      %c0_18 = arith.constant 0 : index
      %c0_19 = arith.constant 0 : index
      %41 = vector.load %arg2[%c0_18, %c0_19] : memref<320x128xbf16, #tpu.memory_space<vmem>>, vector<320x128xbf16>
      %42 = arith.extf %41 : vector<320x128xbf16> to vector<320x128xf32>
      %c0_20 = arith.constant 0 : index
      %c0_21 = arith.constant 0 : index
      %43 = vector.load %arg9[%c0_20, %c0_21] : memref<320x128xf32, #tpu.memory_space<vmem>>, vector<320x128xf32>
      tpu.vector_store %arg9[%c0_20, %c0_21], %42 {strides = array<i32>} : memref<320x128xf32, #tpu.memory_space<vmem>>, vector<320x128xf32>,
    } else {
    }
    %c0 = arith.constant 0 : index
    %c0_1 = arith.constant 0 : index
    %3 = vector.load %arg9[%c0, %c0_1] : memref<320x128xf32, #tpu.memory_space<vmem>>, vector<320x128xf32>
    %c0_2 = arith.constant 0 : index
    %c0_3 = arith.constant 0 : index
    %4 = vector.load %arg4[%c0_2, %c0_3] : memref<320x2xf32, #tpu.memory_space<vmem>>, vector<320x2xf32>
    %5 = arith.index_cast %arg1 : i32 to index
    %c0_4 = arith.constant 0 : index
    %c0_5 = arith.constant 0 : index
    %6 = vector.load %arg5[%5, %c0_4, %c0_5] : memref<2x2x128xf32, #tpu.memory_space<vmem>>, vector<1x2x128xf32>
    %7 = vector.shape_cast %6 : vector<1x2x128xf32> to vector<2x128xf32>
    %8 = arith.index_cast %arg1 : i32 to index
    %c0_6 = arith.constant 0 : index
    %c0_7 = arith.constant 0 : index
    %9 = vector.load %arg7[%8, %c0_6, %c0_7] : memref<2x1x128xf32, #tpu.memory_space<vmem>>, vector<1x1x128xf32>
    %10 = vector.shape_cast %9 : vector<1x1x128xf32> to vector<1x128xf32>
    %c0_8 = arith.constant 0 : index
    %c0_9 = arith.constant 0 : index
    %11 = vector.load %arg3[%c0_8, %c0_9] : memref<320x128xbf16, #tpu.memory_space<vmem>>, vector<320x128xbf16>
    %12 = arith.extf %11 : vector<320x128xbf16> to vector<320x128xf32>
    %13 = arith.addf %3, %12 : vector<320x128xf32>
    %14 = vector.extract_strided_slice %4 {offsets = [0, 0], sizes = [320, 1], strides = [1, 1]} : vector<320x2xf32> to vector<320x1xf32>
    %15 = vector.extract_strided_slice %7 {offsets = [0, 0], sizes = [1, 128], strides = [1, 1]} : vector<2x128xf32> to vector<1x128xf32>
    %16 = vector.broadcast %14 : vector<320x1xf32> to vector<320x128xf32>
    %17 = vector.broadcast %15 : vector<1x128xf32> to vector<320x128xf32>
    %18 = arith.mulf %16, %17 : vector<320x128xf32>
    %19 = arith.addf %13, %18 : vector<320x128xf32>
    %20 = vector.extract_strided_slice %4 {offsets = [0, 1], sizes = [320, 1], strides = [1, 1]} : vector<320x2xf32> to vector<320x1xf32>
    %21 = vector.extract_strided_slice %7 {offsets = [1, 0], sizes = [1, 128], strides = [1, 1]} : vector<2x128xf32> to vector<1x128xf32>
    %22 = vector.broadcast %20 : vector<320x1xf32> to vector<320x128xf32>
    %23 = vector.broadcast %21 : vector<1x128xf32> to vector<320x128xf32>
    %24 = arith.mulf %22, %23 : vector<320x128xf32>
    %25 = arith.addf %19, %24 : vector<320x128xf32>
    %26 = arith.truncf %25 : vector<320x128xf32> to vector<320x128xbf16>
    %27 = arith.index_cast %arg1 : i32 to index
    %c0_10 = arith.constant 0 : index
    %c0_11 = arith.constant 0 : index
    %28 = vector.load %arg6[%27, %c0_10, %c0_11] : memref<2x128x128xbf16, #tpu.memory_space<vmem>>, vector<1x128x128xbf16>
    %29 = vector.shape_cast %28 : vector<1x128x128xbf16> to vector<128x128xbf16>
    %cst = arith.constant dense<0.000000e+00> : vector<320x128xf32>
    %30 = tpu.matmul %26, %29, %cst {dimension_numbers = #tpu.dot_dimension_numbers<[1], [0], [0], [1], [0, 0, 1, 1], [], []>} : vector<320x128xbf16>, vector<128x128xbf16>, vector<320x128xf32> -> vector<320x128xf32>
    %31 = vector.broadcast %10 : vector<1x128xf32> to vector<320x128xf32>
    %32 = arith.addf %30, %31 : vector<320x128xf32>
    %cst_12 = arith.constant 0.000000e+00 : f32
    %33 = vector.broadcast %cst_12 : f32 to vector<320x128xf32>
    %34 = arith.maximumf %32, %33 : vector<320x128xf32>
    %35 = arith.addf %3, %34 : vector<320x128xf32>
    %c0_13 = arith.constant 0 : index
    %c0_14 = arith.constant 0 : index
    %36 = vector.load %arg9[%c0_13, %c0_14] : memref<320x128xf32, #tpu.memory_space<vmem>>, vector<320x128xf32>
    tpu.vector_store %arg9[%c0_13, %c0_14], %35 {strides = array<i32>} : memref<320x128xf32, #tpu.memory_space<vmem>>, vector<320x128xf32>,
    %37 = arith.truncf %35 : vector<320x128xf32> to vector<320x128xbf16>
    %c0_15 = arith.constant 0 : index
    %c0_16 = arith.constant 0 : index
    %c0_17 = arith.constant 0 : index
    %38 = vector.load %arg8[%c0_15, %c0_16, %c0_17] : memref<1x320x128xbf16, #tpu.memory_space<vmem>>, vector<1x320x128xbf16>
    %39 = vector.shape_cast %38 : vector<1x320x128xbf16> to vector<320x128xbf16>
    %40 = vector.shape_cast %37 : vector<320x128xbf16> to vector<1x320x128xbf16>
    tpu.vector_store %arg8[%c0_15, %c0_16, %c0_17], %40 {strides = array<i32>} : memref<1x320x128xbf16, #tpu.memory_space<vmem>>, vector<1x320x128xbf16>,
    return
  }
  func.func @transform_0(%arg0: i32, %arg1: i32) -> (i32, i32) {
    %c0_i32 = arith.constant 0 : i32
    %c0_i32_0 = arith.constant 0 : i32
    return %arg0, %c0_i32 : i32, i32
  }
  func.func @transform_1(%arg0: i32, %arg1: i32) -> (i32, i32) {
    %c0_i32 = arith.constant 0 : i32
    %c0_i32_0 = arith.constant 0 : i32
    return %arg0, %c0_i32 : i32, i32
  }
  func.func @transform_2(%arg0: i32, %arg1: i32) -> (i32, i32) {
    %c0_i32 = arith.constant 0 : i32
    %c0_i32_0 = arith.constant 0 : i32
    return %arg0, %c0_i32 : i32, i32
  }
  func.func @transform_3(%arg0: i32, %arg1: i32) -> (i32, i32, i32) {
    %c0_i32 = arith.constant 0 : i32
    %c0_i32_0 = arith.constant 0 : i32
    %c0_i32_1 = arith.constant 0 : i32
    %c0_i32_2 = arith.constant 0 : i32
    return %c0_i32, %c0_i32_0, %c0_i32_1 : i32, i32, i32
  }
  func.func @transform_4(%arg0: i32, %arg1: i32) -> (i32, i32, i32) {
    %c0_i32 = arith.constant 0 : i32
    %c0_i32_0 = arith.constant 0 : i32
    %c0_i32_1 = arith.constant 0 : i32
    %c0_i32_2 = arith.constant 0 : i32
    return %c0_i32, %c0_i32_0, %c0_i32_1 : i32, i32, i32
  }
  func.func @transform_5(%arg0: i32, %arg1: i32) -> (i32, i32, i32) {
    %c0_i32 = arith.constant 0 : i32
    %c0_i32_0 = arith.constant 0 : i32
    %c0_i32_1 = arith.constant 0 : i32
    %c0_i32_2 = arith.constant 0 : i32
    return %c0_i32, %c0_i32_0, %c0_i32_1 : i32, i32, i32
  }
  func.func @transform_6(%arg0: i32, %arg1: i32) -> (i32, i32, i32) {
    %c0_i32 = arith.constant 0 : i32
    %c0_i32_0 = arith.constant 0 : i32
    return %arg1, %arg0, %c0_i32 : i32, i32, i32
  }
}

</mosaic_0001>

<llo_original>
// kernel: tpu_custom_call.1
$region0: #{tpu_custom_call.1}
  #allocation0 [shape = 'u32[]', space=smem, size = 0x4, offset = 0x4, fixed_abs, tag = 'smem constant byte address 0x4 - core index']
  #allocation1 [shape = 'u32[144,128]{1,0:T(1,128)}', space=vmem, size = 0x12000, scoped, tag = 'internal scratch']
  #allocation2 [shape = 'f32[320,128]{1,0:T(8,128)}', space=vmem, size = 0x28000, scoped, tag = 'scratch operand']
  %s0 = inlined_call_operand.vmem [shape: bf16[640,128], index: 0, kind: input, shape index: {}]
  %s1 = inlined_call_operand.vmem [shape: bf16[640,128], index: 1, kind: input, shape index: {}]
  %s2 = inlined_call_operand.vmem [shape: f32[640,2], index: 2, kind: input, shape index: {}]
  %s3 = inlined_call_operand.vmem [shape: f32[2,2,128], index: 3, kind: input, shape index: {}]
  %s4 = inlined_call_operand.hbm [shape: bf16[2,128,128], index: 4, kind: input, shape index: {}]
  %s5 = inlined_call_operand.vmem [shape: f32[2,1,128], index: 5, kind: input, shape index: {}]
  %s6 = inlined_call_operand.hbm [shape: bf16[2,640,128], index: 6, kind: output, shape index: {}]
  %s7 = sld [smem:[#allocation0]]
  $region65: #{tpu_custom_call.1} parent=0
    _
  %s9 = ssub.s32 1, %s7
  %s10 = scalar_select 0, %s9, %s7
  $region1: #{tpu_custom_call.1} parent=0
    #allocation3 [shape = 'u8[65536]{0}', space=vmem, size = 0x10000, scoped, tag = 'input window, operand 4, single buffered']
    #allocation4 [shape = 's32[2]{0}', space=sflag, size = 0x8, scoped, tag = 'scoped memory for tpu_custom_call.1']
    #allocation5 [shape = 's32[2]{0}', space=sflag, size = 0x8, scoped, tag = 'scoped memory for tpu_custom_call.1']
    #allocation6 [shape = 'u8[163840]{0}', space=vmem, size = 0x28000, scoped, tag = 'output window, operand 0']
    %11 = vsyncpa [#allocation4], 0
    %12 = vsyncpa [#allocation5], 0
    %s13 = scalar_lea.sflag [#allocation5], 1
    %14 = vsyncpa %s13, 0
    loop: start=0, step=1, limit=6
    $region2: #{tpu_custom_call.1} parent=1 // loop_pre_header
      _
    $region3: #{tpu_custom_call.1} parent=1 // loop_header
      %s16 = sphi 0, %s20
      %p17 = scmp.ge.s32.totalorder %s16, 6
      %s23 = sphi 0, %s35
      %s24 = sphi 0, %s31
      %s25 = sphi 0, %s23
      %s26 = sphi 0, %s24
      %s27 = sphi 0, %s25
      %s28 = sphi 0, %s26
      %s38 = sphi 0, %s40
      %s41 = sphi 0, %s38
      %s42 = sphi 0, %s41
      %s58 = sphi 0, %s42
      %s64 = sphi 0, %s66
      %s67 = sphi 0, %s64
      %s68 = sphi 0, %s67
      %s84 = sphi 0, %s68
      %s90 = sphi 0, %s92
      %s93 = sphi 0, %s90
      %s94 = sphi 0, %s93
      %s110 = sphi 0, %s94
      %s114 = sphi 0, %s114
      %s116 = sphi 0, %s114
      %s117 = sphi 0, %s116
      %s131 = sphi 0, %s117
      %s135 = sphi 0, %s135
      %s137 = sphi 0, %s135
      %s138 = sphi 0, %s137
      %s152 = sphi 0, %s138
      %s156 = sphi 0, %s156
      %s158 = sphi 0, %s156
      %s159 = sphi 0, %s158
      %s173 = sphi 0, %s159
      %s181 = sphi 0, %s183
      %s184 = sphi 0, %s181
      %s185 = sphi 0, %s184
      %s201 = sphi 0, %s185
    $region4: #{tpu_custom_call.1} parent=1 // loop_header_branch
      %19 = sbr.rel (%p17) target = $region8
    $region5: #{tpu_custom_call.1} parent=1 // loop_body
      %s21 = ssub.s32 %s16, 1
      %s22 = ssub.s32 %s16, 2
      %s29 = sadd.s32 1, %s24
      %p30 = scmp.ge.s32.totalorder %s29, 2
      %s31 = scalar_select %p30, 0, %s29
      %s32 = sadd.s32 1, %s23
      %s33 = scalar_select %p30, %s32, %s23
      %p34 = scmp.ge.s32.totalorder %s33, 2
      %s35 = scalar_select %p34, 0, %s33
      %s36 = ssub.s32 %s23, %s35
      %p37 = scmp.eq.s32.totalorder %s36, 0
      %s39 = sadd.s32 %s38, 1
      %s40 = scalar_select %p37, %s38, %s39
      %p43 = pneg %p37
      %p44 = scmp.eq.s32.totalorder %s16, 3
      %p45 = por %p43, %p44
      %p46 = scmp.ne.s32.totalorder %s38, %s41
      %p47 = scmp.eq.s32.totalorder %s16, 0
      %p48 = por %p46, %p47
      %p49 = scmp.ne.s32.totalorder %s38, %s41
      %p50 = scmp.eq.s32.totalorder %s21, 3
      %p51 = por %p49, %p50
      %p52 = scmp.ne.s32.totalorder %s41, %s42
      %p53 = scmp.eq.s32.totalorder %s21, 0
      %p54 = por %p52, %p53
      %p55 = scmp.ne.s32.totalorder %s41, %s42
      %p56 = scmp.eq.s32.totalorder %s22, 3
      %p57 = por %p55, %p56
      %p59 = scmp.ne.s32.totalorder %s42, %s58
      %p60 = scmp.eq.s32.totalorder %s22, 0
      %p61 = por %p59, %p60
      %s62 = ssub.s32 %s23, %s35
      %p63 = scmp.eq.s32.totalorder %s62, 0
      %s65 = sadd.s32 %s64, 1
      %s66 = scalar_select %p63, %s64, %s65
      %p69 = pneg %p63
      %p70 = scmp.eq.s32.totalorder %s16, 3
      %p71 = por %p69, %p70
      %p72 = scmp.ne.s32.totalorder %s64, %s67
      %p73 = scmp.eq.s32.totalorder %s16, 0
      %p74 = por %p72, %p73
      %p75 = scmp.ne.s32.totalorder %s64, %s67
      %p76 = scmp.eq.s32.totalorder %s21, 3
      %p77 = por %p75, %p76
      %p78 = scmp.ne.s32.totalorder %s67, %s68
      %p79 = scmp.eq.s32.totalorder %s21, 0
      %p80 = por %p78, %p79
      %p81 = scmp.ne.s32.totalorder %s67, %s68
      %p82 = scmp.eq.s32.totalorder %s22, 3
      %p83 = por %p81, %p82
      %p85 = scmp.ne.s32.totalorder %s68, %s84
      %p86 = scmp.eq.s32.totalorder %s22, 0
      %p87 = por %p85, %p86
      %s88 = ssub.s32 %s23, %s35
      %p89 = scmp.eq.s32.totalorder %s88, 0
      %s91 = sadd.s32 %s90, 1
      %s92 = scalar_select %p89, %s90, %s91
      %p95 = pneg %p89
      %p96 = scmp.eq.s32.totalorder %s16, 3
      %p97 = por %p95, %p96
      %p98 = scmp.ne.s32.totalorder %s90, %s93
      %p99 = scmp.eq.s32.totalorder %s16, 0
      %p100 = por %p98, %p99
      %p101 = scmp.ne.s32.totalorder %s90, %s93
      %p102 = scmp.eq.s32.totalorder %s21, 3
      %p103 = por %p101, %p102
      %p104 = scmp.ne.s32.totalorder %s93, %s94
      %p105 = scmp.eq.s32.totalorder %s21, 0
      %p106 = por %p104, %p105
      %p107 = scmp.ne.s32.totalorder %s93, %s94
      %p108 = scmp.eq.s32.totalorder %s22, 3
      %p109 = por %p107, %p108
      %p111 = scmp.ne.s32.totalorder %s94, %s110
      %p112 = scmp.eq.s32.totalorder %s22, 0
      %p113 = por %p111, %p112
      %s115 = sadd.s32 %s114, 1
      %p118 = scmp.eq.s32.totalorder %s16, 3
      %p119 = scmp.ne.s32.totalorder %s114, %s116
      %p120 = scmp.eq.s32.totalorder %s16, 0
      %p121 = por %p119, %p120
      %p122 = scmp.ne.s32.totalorder %s114, %s116
      %p123 = scmp.eq.s32.totalorder %s21, 3
      %p124 = por %p122, %p123
      %p125 = scmp.ne.s32.totalorder %s116, %s117
      %p126 = scmp.eq.s32.totalorder %s21, 0
      %p127 = por %p125, %p126
      %p128 = scmp.ne.s32.totalorder %s116, %s117
      %p129 = scmp.eq.s32.totalorder %s22, 3
      %p130 = por %p128, %p129
      %p132 = scmp.ne.s32.totalorder %s117, %s131
      %p133 = scmp.eq.s32.totalorder %s22, 0
      %p134 = por %p132, %p133
      %s136 = sadd.s32 %s135, 1
      %p139 = scmp.eq.s32.totalorder %s16, 3
      %p140 = scmp.ne.s32.totalorder %s135, %s137
      %p141 = scmp.eq.s32.totalorder %s16, 0
      %p142 = por %p140, %p141
      %p143 = scmp.ne.s32.totalorder %s135, %s137
      %p144 = scmp.eq.s32.totalorder %s21, 3
      %p145 = por %p143, %p144
      %p146 = scmp.ne.s32.totalorder %s137, %s138
      %p147 = scmp.eq.s32.totalorder %s21, 0
      %p148 = por %p146, %p147
      %p149 = scmp.ne.s32.totalorder %s137, %s138
      %p150 = scmp.eq.s32.totalorder %s22, 3
      %p151 = por %p149, %p150
      %p153 = scmp.ne.s32.totalorder %s138, %s152
      %p154 = scmp.eq.s32.totalorder %s22, 0
      %p155 = por %p153, %p154
      %s157 = sadd.s32 %s156, 1
      %p160 = scmp.eq.s32.totalorder %s16, 3
      %p161 = scmp.ne.s32.totalorder %s156, %s158
      %p162 = scmp.eq.s32.totalorder %s16, 0
      %p163 = por %p161, %p162
      %p164 = scmp.ne.s32.totalorder %s156, %s158
      %p165 = scmp.eq.s32.totalorder %s21, 3
      %p166 = por %p164, %p165
      %p167 = scmp.ne.s32.totalorder %s158, %s159
      %p168 = scmp.eq.s32.totalorder %s21, 0
      %p169 = por %p167, %p168
      %p170 = scmp.ne.s32.totalorder %s158, %s159
      %p171 = scmp.eq.s32.totalorder %s22, 3
      %p172 = por %p170, %p171
      %p174 = scmp.ne.s32.totalorder %s159, %s173
      %p175 = scmp.eq.s32.totalorder %s22, 0
      %p176 = por %p174, %p175
      %s177 = ssub.s32 %s24, %s31
      %s178 = ssub.s32 %s23, %s35
      %s179 = sor.u32 %s177, %s178
      %p180 = scmp.eq.s32.totalorder %s179, 0
      %s182 = sadd.s32 %s181, 1
      %s183 = scalar_select %p180, %s181, %s182
      %p186 = pneg %p180
      %p187 = scmp.eq.s32.totalorder %s16, 3
      %p188 = por %p186, %p187
      %p189 = scmp.ne.s32.totalorder %s181, %s184
      %p190 = scmp.eq.s32.totalorder %s16, 0
      %p191 = por %p189, %p190
      %p192 = scmp.ne.s32.totalorder %s181, %s184
      %p193 = scmp.eq.s32.totalorder %s21, 3
      %p194 = por %p192, %p193
      %p195 = scmp.ne.s32.totalorder %s184, %s185
      %p196 = scmp.eq.s32.totalorder %s21, 0
      %p197 = por %p195, %p196
      %p198 = scmp.ne.s32.totalorder %s184, %s185
      %p199 = scmp.eq.s32.totalorder %s22, 3
      %p200 = por %p198, %p199
      %p202 = scmp.ne.s32.totalorder %s185, %s201
      %p203 = scmp.eq.s32.totalorder %s22, 0
      %p204 = por %p202, %p203
      %p205 = scmp.le.s32.totalorder 1, %s16
      %p206 = scmp.lt.s32.totalorder %s16, 5
      %p207 = pnand %p205, %p206
      %p208 = pneg %p207
      // Predicated region
      $region9: #{tpu_custom_call.1} parent=5 // pred_check
        _
      $region10: #{tpu_custom_call.1} parent=5 // pred_check_branch
        %210 = sbr.rel (%p207) target = $region12
      $region11: #{tpu_custom_call.1} parent=5 // pred_region
        %s211 = ssub.s32 %s16, 1
        // Predicated region
        $region13: #{tpu_custom_call.1} parent=11 // pred_check
          %p212 = pneg %p127
        $region14: #{tpu_custom_call.1} parent=11 // pred_check_branch
          %214 = sbr.rel (%p212) target = $region16
        $region15: #{tpu_custom_call.1} parent=11 // pred_region
          _
        $region16: #{tpu_custom_call.1} parent=11 // pred_fallthru
          _
        // Predicated region
        $region17: #{tpu_custom_call.1} parent=11 // pred_check
          %p215 = pneg %p148
        $region18: #{tpu_custom_call.1} parent=11 // pred_check_branch
          %217 = sbr.rel (%p215) target = $region20
        $region19: #{tpu_custom_call.1} parent=11 // pred_region
          %s219 = ssub.s32 2048, 2048
          %220 = vsyncadd [#allocation4], %s219
          %s221 = sshll.u32 [#allocation3], 4
          %s222 = int_to_ptr.vmem [resolvable:$true] %s221
          %227 = dma.hbm_to_vmem [thread:$0]  %s4, 2048, %s222, [#allocation4], 64, 64, 4
        $region20: #{tpu_custom_call.1} parent=11 // pred_fallthru
          _
        // Predicated region
        $region21: #{tpu_custom_call.1} parent=11 // pred_check
          %p228 = pneg %p169
        $region22: #{tpu_custom_call.1} parent=11 // pred_check_branch
          %230 = sbr.rel (%p228) target = $region24
        $region23: #{tpu_custom_call.1} parent=11 // pred_region
          _
        $region24: #{tpu_custom_call.1} parent=11 // pred_fallthru
          _
      $region12: #{tpu_custom_call.1} parent=5 // pred_fallthru
        _
      %p231 = scmp.lt.s32.totalorder %s16, 4
      // Predicated region
      $region25: #{tpu_custom_call.1} parent=5 // pred_check
        %p232 = pneg %p231
      $region26: #{tpu_custom_call.1} parent=5 // pred_check_branch
        %234 = sbr.rel (%p232) target = $region28
      $region27: #{tpu_custom_call.1} parent=5 // pred_region
        // Predicated region
        $region29: #{tpu_custom_call.1} parent=27 // pred_check
          %p235 = pneg %p48
        $region30: #{tpu_custom_call.1} parent=27 // pred_check_branch
          %237 = sbr.rel (%p235) target = $region32
        $region31: #{tpu_custom_call.1} parent=27 // pred_region
          %s238 = smul.u32 40, %s23
          %p239 = scmp.lt.s32.totalorder %s238, 79
          %s240 = scalar_select %p239, %s238, 79
          %s241 = smul.addr %s240, 4
          %s242 = scalar_lea.vmem %s0, %s241
          %s243 = smul.u32 40, %s23
        $region32: #{tpu_custom_call.1} parent=27 // pred_fallthru
          _
        // Predicated region
        $region33: #{tpu_custom_call.1} parent=27 // pred_check
          %p244 = pneg %p74
        $region34: #{tpu_custom_call.1} parent=27 // pred_check_branch
          %246 = sbr.rel (%p244) target = $region36
        $region35: #{tpu_custom_call.1} parent=27 // pred_region
          %s247 = smul.u32 40, %s23
          %p248 = scmp.lt.s32.totalorder %s247, 79
          %s249 = scalar_select %p248, %s247, 79
          %s250 = smul.addr %s249, 4
          %s251 = scalar_lea.vmem %s1, %s250
          %s252 = smul.u32 40, %s23
        $region36: #{tpu_custom_call.1} parent=27 // pred_fallthru
          _
        // Predicated region
        $region37: #{tpu_custom_call.1} parent=27 // pred_check
          %p253 = pneg %p100
        $region38: #{tpu_custom_call.1} parent=27 // pred_check_branch
          %255 = sbr.rel (%p253) target = $region40
        $region39: #{tpu_custom_call.1} parent=27 // pred_region
          %s256 = smul.u32 40, %s23
          %p257 = scmp.lt.s32.totalorder %s256, 79
          %s258 = scalar_select %p257, %s256, 79
          %s259 = smul.addr %s258, 8
          %s260 = scalar_lea.vmem %s2, %s259
          %s261 = smul.u32 40, %s23
        $region40: #{tpu_custom_call.1} parent=27 // pred_fallthru
          _
      $region28: #{tpu_custom_call.1} parent=5 // pred_fallthru
        _
      %p262 = scmp.le.s32.totalorder 1, %s16
      %p263 = scmp.lt.s32.totalorder %s16, 5
      %p264 = pnand %p262, %p263
      %p265 = pneg %p264
      // Predicated region
      $region41: #{tpu_custom_call.1} parent=5 // pred_check
        _
      $region42: #{tpu_custom_call.1} parent=5 // pred_check_branch
        %267 = sbr.rel (%p264) target = $region44
      $region43: #{tpu_custom_call.1} parent=5 // pred_region
        %s268 = ssub.s32 %s16, 1
        // Predicated region
        $region45: #{tpu_custom_call.1} parent=43 // pred_check
          %p269 = pneg %p148
        $region46: #{tpu_custom_call.1} parent=43 // pred_check_branch
          %271 = sbr.rel (%p269) target = $region48
        $region47: #{tpu_custom_call.1} parent=43 // pred_region
          %272 = dma.done [#allocation4], 2048
        $region48: #{tpu_custom_call.1} parent=43 // pred_fallthru
          _
        %s273 = smul.u32 40, %s25
        %p274 = scmp.lt.s32.totalorder %s273, 79
        %s275 = scalar_select %p274, %s273, 79
        %s276 = smul.addr %s275, 4
        %s277 = scalar_lea.vmem %s0, %s276
        %p278 = pneg %p54
        %p279 = pneg %p51
        %s280 = smul.u32 40, %s25
        %p281 = scmp.lt.s32.totalorder %s280, 79
        %s282 = scalar_select %p281, %s280, 79
        %s283 = smul.addr %s282, 4
        %s284 = scalar_lea.vmem %s1, %s283
        %p285 = pneg %p80
        %p286 = pneg %p77
        %s287 = smul.u32 40, %s25
        %p288 = scmp.lt.s32.totalorder %s287, 79
        %s289 = scalar_select %p288, %s287, 79
        %s290 = smul.addr %s289, 8
        %s291 = scalar_lea.vmem %s2, %s290
        %p292 = pneg %p106
        %p293 = pneg %p103
        %p294 = pneg %p127
        %p295 = pneg %p124
        %p296 = pneg %p148
        %p297 = pneg %p145
        %p298 = pneg %p169
        %p299 = pneg %p166
        %p300 = pneg %p197
        %p301 = pneg %p194
        %s302 = sand.u32 %s184, 1
        %s303 = scalar_lea.sflag [#allocation5], %s302
        %s304 = sand.u32 %s184, 1
        %s305 = smul.addr %s304, 160
        %s306 = scalar_lea.vmem [#allocation6], %s305
        %s307 = smul.u32 40, %s25
        %p308 = scmp.lt.s32.totalorder %s307, 79
        %s309 = scalar_select %p308, %s307, 79
        %s310 = smul.addr %s309, 4
        %s311 = scalar_lea.vmem %s0, %s310
        %s312 = smul.u32 40, %s25
        %s313 = smul.u32 40, %s25
        %p314 = scmp.lt.s32.totalorder %s313, 79
        %s315 = scalar_select %p314, %s313, 79
        %s316 = smul.addr %s315, 4
        %s317 = scalar_lea.vmem %s1, %s316
        %s318 = smul.u32 40, %s25
        %s319 = smul.u32 40, %s25
        %p320 = scmp.lt.s32.totalorder %s319, 79
        %s321 = scalar_select %p320, %s319, 79
        %s322 = smul.addr %s321, 8
        %s323 = scalar_lea.vmem %s2, %s322
        %s324 = smul.u32 40, %s25
        %s325 = smul.u32 40, %s25
        %p327 = scmp.eq.s32.totalorder %s26, 0
        // Predicated region
        $region49: #{tpu_custom_call.1} parent=43 // pred_check
          %p328 = pneg %p327
        $region50: #{tpu_custom_call.1} parent=43 // pred_check_branch
          %330 = sbr.rel (%p328) target = $region52
        $region51: #{tpu_custom_call.1} parent=43 // pred_region
          %v331 = vld [vmem:[%s311] sm:$0xf]
          %v332 = vld [vmem:[%s311 + $0x4] sm:$0xf]
          %v333 = vld [vmem:[%s311 + $0x8] sm:$0xf]
          %v334 = vld [vmem:[%s311 + $0xc] sm:$0xf]
          %v335 = vld [vmem:[%s311 + $0x10] sm:$0xf]
          %v336 = vld [vmem:[%s311 + $0x14] sm:$0xf]
          %v337 = vld [vmem:[%s311 + $0x18] sm:$0xf]
          %v338 = vld [vmem:[%s311 + $0x1c] sm:$0xf]
          %v339 = vld [vmem:[%s311 + $0x20] sm:$0xf]
          %v340 = vld [vmem:[%s311 + $0x24] sm:$0xf]
          %v341 = vld [vmem:[%s311 + $0x28] sm:$0xf]
          %v342 = vld [vmem:[%s311 + $0x2c] sm:$0xf]
          %v343 = vld [vmem:[%s311 + $0x30] sm:$0xf]
          %v344 = vld [vmem:[%s311 + $0x34] sm:$0xf]
          %v345 = vld [vmem:[%s311 + $0x38] sm:$0xf]
          %v346 = vld [vmem:[%s311 + $0x3c] sm:$0xf]
          %v347 = vld [vmem:[%s311 + $0x40] sm:$0xf]
          %v348 = vld [vmem:[%s311 + $0x44] sm:$0xf]
          %v349 = vld [vmem:[%s311 + $0x48] sm:$0xf]
          %v350 = vld [vmem:[%s311 + $0x4c] sm:$0xf]
          %v351 = vld [vmem:[%s311 + $0x50] sm:$0xf]
          %v352 = vld [vmem:[%s311 + $0x54] sm:$0xf]
          %v353 = vld [vmem:[%s311 + $0x58] sm:$0xf]
          %v354 = vld [vmem:[%s311 + $0x5c] sm:$0xf]
          %v355 = vld [vmem:[%s311 + $0x60] sm:$0xf]
          %v356 = vld [vmem:[%s311 + $0x64] sm:$0xf]
          %v357 = vld [vmem:[%s311 + $0x68] sm:$0xf]
          %v358 = vld [vmem:[%s311 + $0x6c] sm:$0xf]
          %v359 = vld [vmem:[%s311 + $0x70] sm:$0xf]
          %v360 = vld [vmem:[%s311 + $0x74] sm:$0xf]
          %v361 = vld [vmem:[%s311 + $0x78] sm:$0xf]
          %v362 = vld [vmem:[%s311 + $0x7c] sm:$0xf]
          %v363 = vld [vmem:[%s311 + $0x80] sm:$0xf]
          %v364 = vld [vmem:[%s311 + $0x84] sm:$0xf]
          %v365 = vld [vmem:[%s311 + $0x88] sm:$0xf]
          %v366 = vld [vmem:[%s311 + $0x8c] sm:$0xf]
          %v367 = vld [vmem:[%s311 + $0x90] sm:$0xf]
          %v368 = vld [vmem:[%s311 + $0x94] sm:$0xf]
          %v369 = vld [vmem:[%s311 + $0x98] sm:$0xf]
          %v370 = vld [vmem:[%s311 + $0x9c] sm:$0xf]
          %v371 = vunpack.c.l.bf16 %v331
          %v372 = vunpack.c.l.bf16 %v332
          %v373 = vunpack.c.l.bf16 %v333
          %v374 = vunpack.c.l.bf16 %v334
          %v375 = vunpack.c.l.bf16 %v335
          %v376 = vunpack.c.l.bf16 %v336
          %v377 = vunpack.c.l.bf16 %v337
          %v378 = vunpack.c.l.bf16 %v338
          %v379 = vunpack.c.l.bf16 %v339
          %v380 = vunpack.c.l.bf16 %v340
          %v381 = vunpack.c.l.bf16 %v341
          %v382 = vunpack.c.l.bf16 %v342
          %v383 = vunpack.c.l.bf16 %v343
          %v384 = vunpack.c.l.bf16 %v344
          %v385 = vunpack.c.l.bf16 %v345
          %v386 = vunpack.c.l.bf16 %v346
          %v387 = vunpack.c.l.bf16 %v347
          %v388 = vunpack.c.l.bf16 %v348
          %v389 = vunpack.c.l.bf16 %v349
          %v390 = vunpack.c.l.bf16 %v350
          %v391 = vunpack.c.l.bf16 %v351
          %v392 = vunpack.c.l.bf16 %v352
          %v393 = vunpack.c.l.bf16 %v353
          %v394 = vunpack.c.l.bf16 %v354
          %v395 = vunpack.c.l.bf16 %v355
          %v396 = vunpack.c.l.bf16 %v356
          %v397 = vunpack.c.l.bf16 %v357
          %v398 = vunpack.c.l.bf16 %v358
          %v399 = vunpack.c.l.bf16 %v359
          %v400 = vunpack.c.l.bf16 %v360
          %v401 = vunpack.c.l.bf16 %v361
          %v402 = vunpack.c.l.bf16 %v362
          %v403 = vunpack.c.l.bf16 %v363
          %v404 = vunpack.c.l.bf16 %v364
          %v405 = vunpack.c.l.bf16 %v365
          %v406 = vunpack.c.l.bf16 %v366
          %v407 = vunpack.c.l.bf16 %v367
          %v408 = vunpack.c.l.bf16 %v368
          %v409 = vunpack.c.l.bf16 %v369
          %v410 = vunpack.c.l.bf16 %v370
          %411 = vst [vmem:[#allocation2] sm:$0xff] %v371
          %412 = vst [vmem:[#allocation2 + $0x8] sm:$0xff] %v372
          %413 = vst [vmem:[#allocation2 + $0x10] sm:$0xff] %v373
          %414 = vst [vmem:[#allocation2 + $0x18] sm:$0xff] %v374
          %415 = vst [vmem:[#allocation2 + $0x20] sm:$0xff] %v375
          %416 = vst [vmem:[#allocation2 + $0x28] sm:$0xff] %v376
          %417 = vst [vmem:[#allocation2 + $0x30] sm:$0xff] %v377
          %418 = vst [vmem:[#allocation2 + $0x38] sm:$0xff] %v378
          %419 = vst [vmem:[#allocation2 + $0x40] sm:$0xff] %v379
          %420 = vst [vmem:[#allocation2 + $0x48] sm:$0xff] %v380
          %421 = vst [vmem:[#allocation2 + $0x50] sm:$0xff] %v381
          %422 = vst [vmem:[#allocation2 + $0x58] sm:$0xff] %v382
          %423 = vst [vmem:[#allocation2 + $0x60] sm:$0xff] %v383
          %424 = vst [vmem:[#allocation2 + $0x68] sm:$0xff] %v384
          %425 = vst [vmem:[#allocation2 + $0x70] sm:$0xff] %v385
          %426 = vst [vmem:[#allocation2 + $0x78] sm:$0xff] %v386
          %427 = vst [vmem:[#allocation2 + $0x80] sm:$0xff] %v387
          %428 = vst [vmem:[#allocation2 + $0x88] sm:$0xff] %v388
          %429 = vst [vmem:[#allocation2 + $0x90] sm:$0xff] %v389
          %430 = vst [vmem:[#allocation2 + $0x98] sm:$0xff] %v390
          %431 = vst [vmem:[#allocation2 + $0xa0] sm:$0xff] %v391
          %432 = vst [vmem:[#allocation2 + $0xa8] sm:$0xff] %v392
          %433 = vst [vmem:[#allocation2 + $0xb0] sm:$0xff] %v393
          %434 = vst [vmem:[#allocation2 + $0xb8] sm:$0xff] %v394
          %435 = vst [vmem:[#allocation2 + $0xc0] sm:$0xff] %v395
          %436 = vst [vmem:[#allocation2 + $0xc8] sm:$0xff] %v396
          %437 = vst [vmem:[#allocation2 + $0xd0] sm:$0xff] %v397
          %438 = vst [vmem:[#allocation2 + $0xd8] sm:$0xff] %v398
          %439 = vst [vmem:[#allocation2 + $0xe0] sm:$0xff] %v399
          %440 = vst [vmem:[#allocation2 + $0xe8] sm:$0xff] %v400
          %441 = vst [vmem:[#allocation2 + $0xf0] sm:$0xff] %v401
          %442 = vst [vmem:[#allocation2 + $0xf8] sm:$0xff] %v402
          %443 = vst [vmem:[#allocation2 + $0x100] sm:$0xff] %v403
          %444 = vst [vmem:[#allocation2 + $0x108] sm:$0xff] %v404
          %445 = vst [vmem:[#allocation2 + $0x110] sm:$0xff] %v405
          %446 = vst [vmem:[#allocation2 + $0x118] sm:$0xff] %v406
          %447 = vst [vmem:[#allocation2 + $0x120] sm:$0xff] %v407
          %448 = vst [vmem:[#allocation2 + $0x128] sm:$0xff] %v408
          %449 = vst [vmem:[#allocation2 + $0x130] sm:$0xff] %v409
          %450 = vst [vmem:[#allocation2 + $0x138] sm:$0xff] %v410
        $region52: #{tpu_custom_call.1} parent=43 // pred_fallthru
          _
        %v451 = vld [vmem:[#allocation2] sm:$0xff]
        %v452 = vld [vmem:[#allocation2 + $0x8] sm:$0xff]
        %v453 = vld [vmem:[#allocation2 + $0x10] sm:$0xff]
        %v454 = vld [vmem:[#allocation2 + $0x18] sm:$0xff]
        %v455 = vld [vmem:[#allocation2 + $0x20] sm:$0xff]
        %v456 = vld [vmem:[#allocation2 + $0x28] sm:$0xff]
        %v457 = vld [vmem:[#allocation2 + $0x30] sm:$0xff]
        %v458 = vld [vmem:[#allocation2 + $0x38] sm:$0xff]
        %v459 = vld [vmem:[#allocation2 + $0x40] sm:$0xff]
        %v460 = vld [vmem:[#allocation2 + $0x48] sm:$0xff]
        %v461 = vld [vmem:[#allocation2 + $0x50] sm:$0xff]
        %v462 = vld [vmem:[#allocation2 + $0x58] sm:$0xff]
        %v463 = vld [vmem:[#allocation2 + $0x60] sm:$0xff]
        %v464 = vld [vmem:[#allocation2 + $0x68] sm:$0xff]
        %v465 = vld [vmem:[#allocation2 + $0x70] sm:$0xff]
        %v466 = vld [vmem:[#allocation2 + $0x78] sm:$0xff]
        %v467 = vld [vmem:[#allocation2 + $0x80] sm:$0xff]
        %v468 = vld [vmem:[#allocation2 + $0x88] sm:$0xff]
        %v469 = vld [vmem:[#allocation2 + $0x90] sm:$0xff]
        %v470 = vld [vmem:[#allocation2 + $0x98] sm:$0xff]
        %v471 = vld [vmem:[#allocation2 + $0xa0] sm:$0xff]
        %v472 = vld [vmem:[#allocation2 + $0xa8] sm:$0xff]
        %v473 = vld [vmem:[#allocation2 + $0xb0] sm:$0xff]
        %v474 = vld [vmem:[#allocation2 + $0xb8] sm:$0xff]
        %v475 = vld [vmem:[#allocation2 + $0xc0] sm:$0xff]
        %v476 = vld [vmem:[#allocation2 + $0xc8] sm:$0xff]
        %v477 = vld [vmem:[#allocation2 + $0xd0] sm:$0xff]
        %v478 = vld [vmem:[#allocation2 + $0xd8] sm:$0xff]
        %v479 = vld [vmem:[#allocation2 + $0xe0] sm:$0xff]
        %v480 = vld [vmem:[#allocation2 + $0xe8] sm:$0xff]
        %v481 = vld [vmem:[#allocation2 + $0xf0] sm:$0xff]
        %v482 = vld [vmem:[#allocation2 + $0xf8] sm:$0xff]
        %v483 = vld [vmem:[#allocation2 + $0x100] sm:$0xff]
        %v484 = vld [vmem:[#allocation2 + $0x108] sm:$0xff]
        %v485 = vld [vmem:[#allocation2 + $0x110] sm:$0xff]
        %v486 = vld [vmem:[#allocation2 + $0x118] sm:$0xff]
        %v487 = vld [vmem:[#allocation2 + $0x120] sm:$0xff]
        %v488 = vld [vmem:[#allocation2 + $0x128] sm:$0xff]
        %v489 = vld [vmem:[#allocation2 + $0x130] sm:$0xff]
        %v490 = vld [vmem:[#allocation2 + $0x138] sm:$0xff]
        %v491 = vld [vmem:[%s323] sm:$0xff]
        %v492 = vld [vmem:[%s323 + $0x8] sm:$0xff]
        %v493 = vld [vmem:[%s323 + $0x10] sm:$0xff]
        %v494 = vld [vmem:[%s323 + $0x18] sm:$0xff]
        %v495 = vld [vmem:[%s323 + $0x20] sm:$0xff]
        %v496 = vld [vmem:[%s323 + $0x28] sm:$0xff]
        %v497 = vld [vmem:[%s323 + $0x30] sm:$0xff]
        %v498 = vld [vmem:[%s323 + $0x38] sm:$0xff]
        %v499 = vld [vmem:[%s323 + $0x40] sm:$0xff]
        %v500 = vld [vmem:[%s323 + $0x48] sm:$0xff]
        %v501 = vld [vmem:[%s323 + $0x50] sm:$0xff]
        %v502 = vld [vmem:[%s323 + $0x58] sm:$0xff]
        %v503 = vld [vmem:[%s323 + $0x60] sm:$0xff]
        %v504 = vld [vmem:[%s323 + $0x68] sm:$0xff]
        %v505 = vld [vmem:[%s323 + $0x70] sm:$0xff]
        %v506 = vld [vmem:[%s323 + $0x78] sm:$0xff]
        %v507 = vld [vmem:[%s323 + $0x80] sm:$0xff]
        %v508 = vld [vmem:[%s323 + $0x88] sm:$0xff]
        %v509 = vld [vmem:[%s323 + $0x90] sm:$0xff]
        %v510 = vld [vmem:[%s323 + $0x98] sm:$0xff]
        %v511 = vld [vmem:[%s323 + $0xa0] sm:$0xff]
        %v512 = vld [vmem:[%s323 + $0xa8] sm:$0xff]
        %v513 = vld [vmem:[%s323 + $0xb0] sm:$0xff]
        %v514 = vld [vmem:[%s323 + $0xb8] sm:$0xff]
        %v515 = vld [vmem:[%s323 + $0xc0] sm:$0xff]
        %v516 = vld [vmem:[%s323 + $0xc8] sm:$0xff]
        %v517 = vld [vmem:[%s323 + $0xd0] sm:$0xff]
        %v518 = vld [vmem:[%s323 + $0xd8] sm:$0xff]
        %v519 = vld [vmem:[%s323 + $0xe0] sm:$0xff]
        %v520 = vld [vmem:[%s323 + $0xe8] sm:$0xff]
        %v521 = vld [vmem:[%s323 + $0xf0] sm:$0xff]
        %v522 = vld [vmem:[%s323 + $0xf8] sm:$0xff]
        %v523 = vld [vmem:[%s323 + $0x100] sm:$0xff]
        %v524 = vld [vmem:[%s323 + $0x108] sm:$0xff]
        %v525 = vld [vmem:[%s323 + $0x110] sm:$0xff]
        %v526 = vld [vmem:[%s323 + $0x118] sm:$0xff]
        %v527 = vld [vmem:[%s323 + $0x120] sm:$0xff]
        %v528 = vld [vmem:[%s323 + $0x128] sm:$0xff]
        %v529 = vld [vmem:[%s323 + $0x130] sm:$0xff]
        %v530 = vld [vmem:[%s323 + $0x138] sm:$0xff]
        %s531 = smul.u32 %s26, 2
        %s532 = scalar_lea.vmem %s3, %s531
        %v533 = vld [vmem:[%s532] sm:$0x3]
        %s534 = scalar_lea.vmem %s5, %s26
        %v535 = vld [vmem:[%s534] sm:$0x1]
        %v536 = vld [vmem:[%s317] sm:$0xf]
        %v537 = vld [vmem:[%s317 + $0x4] sm:$0xf]
        %v538 = vld [vmem:[%s317 + $0x8] sm:$0xf]
        %v539 = vld [vmem:[%s317 + $0xc] sm:$0xf]
        %v540 = vld [vmem:[%s317 + $0x10] sm:$0xf]
        %v541 = vld [vmem:[%s317 + $0x14] sm:$0xf]
        %v542 = vld [vmem:[%s317 + $0x18] sm:$0xf]
        %v543 = vld [vmem:[%s317 + $0x1c] sm:$0xf]
        %v544 = vld [vmem:[%s317 + $0x20] sm:$0xf]
        %v545 = vld [vmem:[%s317 + $0x24] sm:$0xf]
        %v546 = vld [vmem:[%s317 + $0x28] sm:$0xf]
        %v547 = vld [vmem:[%s317 + $0x2c] sm:$0xf]
        %v548 = vld [vmem:[%s317 + $0x30] sm:$0xf]
        %v549 = vld [vmem:[%s317 + $0x34] sm:$0xf]
        %v550 = vld [vmem:[%s317 + $0x38] sm:$0xf]
        %v551 = vld [vmem:[%s317 + $0x3c] sm:$0xf]
        %v552 = vld [vmem:[%s317 + $0x40] sm:$0xf]
        %v553 = vld [vmem:[%s317 + $0x44] sm:$0xf]
        %v554 = vld [vmem:[%s317 + $0x48] sm:$0xf]
        %v555 = vld [vmem:[%s317 + $0x4c] sm:$0xf]
        %v556 = vld [vmem:[%s317 + $0x50] sm:$0xf]
        %v557 = vld [vmem:[%s317 + $0x54] sm:$0xf]
        %v558 = vld [vmem:[%s317 + $0x58] sm:$0xf]
        %v559 = vld [vmem:[%s317 + $0x5c] sm:$0xf]
        %v560 = vld [vmem:[%s317 + $0x60] sm:$0xf]
        %v561 = vld [vmem:[%s317 + $0x64] sm:$0xf]
        %v562 = vld [vmem:[%s317 + $0x68] sm:$0xf]
        %v563 = vld [vmem:[%s317 + $0x6c] sm:$0xf]
        %v564 = vld [vmem:[%s317 + $0x70] sm:$0xf]
        %v565 = vld [vmem:[%s317 + $0x74] sm:$0xf]
        %v566 = vld [vmem:[%s317 + $0x78] sm:$0xf]
        %v567 = vld [vmem:[%s317 + $0x7c] sm:$0xf]
        %v568 = vld [vmem:[%s317 + $0x80] sm:$0xf]
        %v569 = vld [vmem:[%s317 + $0x84] sm:$0xf]
        %v570 = vld [vmem:[%s317 + $0x88] sm:$0xf]
        %v571 = vld [vmem:[%s317 + $0x8c] sm:$0xf]
        %v572 = vld [vmem:[%s317 + $0x90] sm:$0xf]
        %v573 = vld [vmem:[%s317 + $0x94] sm:$0xf]
        %v574 = vld [vmem:[%s317 + $0x98] sm:$0xf]
        %v575 = vld [vmem:[%s317 + $0x9c] sm:$0xf]
        %v576 = vunpack.c.l.bf16 %v536
        %v577 = vunpack.c.l.bf16 %v537
        %v578 = vunpack.c.l.bf16 %v538
        %v579 = vunpack.c.l.bf16 %v539
        %v580 = vunpack.c.l.bf16 %v540
        %v581 = vunpack.c.l.bf16 %v541
        %v582 = vunpack.c.l.bf16 %v542
        %v583 = vunpack.c.l.bf16 %v543
        %v584 = vunpack.c.l.bf16 %v544
        %v585 = vunpack.c.l.bf16 %v545
        %v586 = vunpack.c.l.bf16 %v546
        %v587 = vunpack.c.l.bf16 %v547
        %v588 = vunpack.c.l.bf16 %v548
        %v589 = vunpack.c.l.bf16 %v549
        %v590 = vunpack.c.l.bf16 %v550
        %v591 = vunpack.c.l.bf16 %v551
        %v592 = vunpack.c.l.bf16 %v552
        %v593 = vunpack.c.l.bf16 %v553
        %v594 = vunpack.c.l.bf16 %v554
        %v595 = vunpack.c.l.bf16 %v555
        %v596 = vunpack.c.l.bf16 %v556
        %v597 = vunpack.c.l.bf16 %v557
        %v598 = vunpack.c.l.bf16 %v558
        %v599 = vunpack.c.l.bf16 %v559
        %v600 = vunpack.c.l.bf16 %v560
        %v601 = vunpack.c.l.bf16 %v561
        %v602 = vunpack.c.l.bf16 %v562
        %v603 = vunpack.c.l.bf16 %v563
        %v604 = vunpack.c.l.bf16 %v564
        %v605 = vunpack.c.l.bf16 %v565
        %v606 = vunpack.c.l.bf16 %v566
        %v607 = vunpack.c.l.bf16 %v567
        %v608 = vunpack.c.l.bf16 %v568
        %v609 = vunpack.c.l.bf16 %v569
        %v610 = vunpack.c.l.bf16 %v570
        %v611 = vunpack.c.l.bf16 %v571
        %v612 = vunpack.c.l.bf16 %v572
        %v613 = vunpack.c.l.bf16 %v573
        %v614 = vunpack.c.l.bf16 %v574
        %v615 = vunpack.c.l.bf16 %v575
        %v616 = vadd.f32 %v451, %v576
        %v617 = vadd.f32 %v452, %v577
        %v618 = vadd.f32 %v453, %v578
        %v619 = vadd.f32 %v454, %v579
        %v620 = vadd.f32 %v455, %v580
        %v621 = vadd.f32 %v456, %v581
        %v622 = vadd.f32 %v457, %v582
        %v623 = vadd.f32 %v458, %v583
        %v624 = vadd.f32 %v459, %v584
        %v625 = vadd.f32 %v460, %v585
        %v626 = vadd.f32 %v461, %v586
        %v627 = vadd.f32 %v462, %v587
        %v628 = vadd.f32 %v463, %v588
        %v629 = vadd.f32 %v464, %v589
        %v630 = vadd.f32 %v465, %v590
        %v631 = vadd.f32 %v466, %v591
        %v632 = vadd.f32 %v467, %v592
        %v633 = vadd.f32 %v468, %v593
        %v634 = vadd.f32 %v469, %v594
        %v635 = vadd.f32 %v470, %v595
        %v636 = vadd.f32 %v471, %v596
        %v637 = vadd.f32 %v472, %v597
        %v638 = vadd.f32 %v473, %v598
        %v639 = vadd.f32 %v474, %v599
        %v640 = vadd.f32 %v475, %v600
        %v641 = vadd.f32 %v476, %v601
        %v642 = vadd.f32 %v477, %v602
        %v643 = vadd.f32 %v478, %v603
        %v644 = vadd.f32 %v479, %v604
        %v645 = vadd.f32 %v480, %v605
        %v646 = vadd.f32 %v481, %v606
        %v647 = vadd.f32 %v482, %v607
        %v648 = vadd.f32 %v483, %v608
        %v649 = vadd.f32 %v484, %v609
        %v650 = vadd.f32 %v485, %v610
        %v651 = vadd.f32 %v486, %v611
        %v652 = vadd.f32 %v487, %v612
        %v653 = vadd.f32 %v488, %v613
        %v654 = vadd.f32 %v489, %v614
        %v655 = vadd.f32 %v490, %v615
        %657 = vset.pattern.permute.xlu0 0
        %658 = vperm.xlu0 %657, %v491
        %v659 = vpop.permute.xlu0 %658
        %662 = vset.pattern.permute.xlu0 0
        %663 = vperm.xlu0 %662, %v492
        %v664 = vpop.permute.xlu0 %663
        %667 = vset.pattern.permute.xlu0 0
        %668 = vperm.xlu0 %667, %v493
        %v669 = vpop.permute.xlu0 %668
        %672 = vset.pattern.permute.xlu0 0
        %673 = vperm.xlu0 %672, %v494
        %v674 = vpop.permute.xlu0 %673
        %677 = vset.pattern.permute.xlu0 0
        %678 = vperm.xlu0 %677, %v495
        %v679 = vpop.permute.xlu0 %678
        %682 = vset.pattern.permute.xlu0 0
        %683 = vperm.xlu0 %682, %v496
        %v684 = vpop.permute.xlu0 %683
        %687 = vset.pattern.permute.xlu0 0
        %688 = vperm.xlu0 %687, %v497
        %v689 = vpop.permute.xlu0 %688
        %692 = vset.pattern.permute.xlu0 0
        %693 = vperm.xlu0 %692, %v498
        %v694 = vpop.permute.xlu0 %693
        %697 = vset.pattern.permute.xlu0 0
        %698 = vperm.xlu0 %697, %v499
        %v699 = vpop.permute.xlu0 %698
        %702 = vset.pattern.permute.xlu0 0
        %703 = vperm.xlu0 %702, %v500
        %v704 = vpop.permute.xlu0 %703
        %707 = vset.pattern.permute.xlu0 0
        %708 = vperm.xlu0 %707, %v501
        %v709 = vpop.permute.xlu0 %708
        %712 = vset.pattern.permute.xlu0 0
        %713 = vperm.xlu0 %712, %v502
        %v714 = vpop.permute.xlu0 %713
        %717 = vset.pattern.permute.xlu0 0
        %718 = vperm.xlu0 %717, %v503
        %v719 = vpop.permute.xlu0 %718
        %722 = vset.pattern.permute.xlu0 0
        %723 = vperm.xlu0 %722, %v504
        %v724 = vpop.permute.xlu0 %723
        %727 = vset.pattern.permute.xlu0 0
        %728 = vperm.xlu0 %727, %v505
        %v729 = vpop.permute.xlu0 %728
        %732 = vset.pattern.permute.xlu0 0
        %733 = vperm.xlu0 %732, %v506
        %v734 = vpop.permute.xlu0 %733
        %737 = vset.pattern.permute.xlu0 0
        %738 = vperm.xlu0 %737, %v507
        %v739 = vpop.permute.xlu0 %738
        %742 = vset.pattern.permute.xlu0 0
        %743 = vperm.xlu0 %742, %v508
        %v744 = vpop.permute.xlu0 %743
        %747 = vset.pattern.permute.xlu0 0
        %748 = vperm.xlu0 %747, %v509
        %v749 = vpop.permute.xlu0 %748
        %752 = vset.pattern.permute.xlu0 0
        %753 = vperm.xlu0 %752, %v510
        %v754 = vpop.permute.xlu0 %753
        %757 = vset.pattern.permute.xlu0 0
        %758 = vperm.xlu0 %757, %v511
        %v759 = vpop.permute.xlu0 %758
        %762 = vset.pattern.permute.xlu0 0
        %763 = vperm.xlu0 %762, %v512
        %v764 = vpop.permute.xlu0 %763
        %767 = vset.pattern.permute.xlu0 0
        %768 = vperm.xlu0 %767, %v513
        %v769 = vpop.permute.xlu0 %768
        %772 = vset.pattern.permute.xlu0 0
        %773 = vperm.xlu0 %772, %v514
        %v774 = vpop.permute.xlu0 %773
        %777 = vset.pattern.permute.xlu0 0
        %778 = vperm.xlu0 %777, %v515
        %v779 = vpop.permute.xlu0 %778
        %782 = vset.pattern.permute.xlu0 0
        %783 = vperm.xlu0 %782, %v516
        %v784 = vpop.permute.xlu0 %783
        %787 = vset.pattern.permute.xlu0 0
        %788 = vperm.xlu0 %787, %v517
        %v789 = vpop.permute.xlu0 %788
        %792 = vset.pattern.permute.xlu0 0
        %793 = vperm.xlu0 %792, %v518
        %v794 = vpop.permute.xlu0 %793
        %797 = vset.pattern.permute.xlu0 0
        %798 = vperm.xlu0 %797, %v519
        %v799 = vpop.permute.xlu0 %798
        %802 = vset.pattern.permute.xlu0 0
        %803 = vperm.xlu0 %802, %v520
        %v804 = vpop.permute.xlu0 %803
        %807 = vset.pattern.permute.xlu0 0
        %808 = vperm.xlu0 %807, %v521
        %v809 = vpop.permute.xlu0 %808
        %812 = vset.pattern.permute.xlu0 0
        %813 = vperm.xlu0 %812, %v522
        %v814 = vpop.permute.xlu0 %813
        %817 = vset.pattern.permute.xlu0 0
        %818 = vperm.xlu0 %817, %v523
        %v819 = vpop.permute.xlu0 %818
        %822 = vset.pattern.permute.xlu0 0
        %823 = vperm.xlu0 %822, %v524
        %v824 = vpop.permute.xlu0 %823
        %827 = vset.pattern.permute.xlu0 0
        %828 = vperm.xlu0 %827, %v525
        %v829 = vpop.permute.xlu0 %828
        %832 = vset.pattern.permute.xlu0 0
        %833 = vperm.xlu0 %832, %v526
        %v834 = vpop.permute.xlu0 %833
        %837 = vset.pattern.permute.xlu0 0
        %838 = vperm.xlu0 %837, %v527
        %v839 = vpop.permute.xlu0 %838
        %842 = vset.pattern.permute.xlu0 0
        %843 = vperm.xlu0 %842, %v528
        %v844 = vpop.permute.xlu0 %843
        %847 = vset.pattern.permute.xlu0 0
        %848 = vperm.xlu0 %847, %v529
        %v849 = vpop.permute.xlu0 %848
        %852 = vset.pattern.permute.xlu0 0
        %853 = vperm.xlu0 %852, %v530
        %v854 = vpop.permute.xlu0 %853
        %v856 = vlaneseq
        %v857 = vshrl.u32 %v856, 7
        %v858 = vsub.s32 0, %v857
        %v859 = vrot.slane %v533, %v858
        %v860 = vmul.f32 %v659, %v859
        %v861 = vmul.f32 %v664, %v859
        %v862 = vmul.f32 %v669, %v859
        %v863 = vmul.f32 %v674, %v859
        %v864 = vmul.f32 %v679, %v859
        %v865 = vmul.f32 %v684, %v859
        %v866 = vmul.f32 %v689, %v859
        %v867 = vmul.f32 %v694, %v859
        %v868 = vmul.f32 %v699, %v859
        %v869 = vmul.f32 %v704, %v859
        %v870 = vmul.f32 %v709, %v859
        %v871 = vmul.f32 %v714, %v859
        %v872 = vmul.f32 %v719, %v859
        %v873 = vmul.f32 %v724, %v859
        %v874 = vmul.f32 %v729, %v859
        %v875 = vmul.f32 %v734, %v859
        %v876 = vmul.f32 %v739, %v859
        %v877 = vmul.f32 %v744, %v859
        %v878 = vmul.f32 %v749, %v859
        %v879 = vmul.f32 %v754, %v859
        %v880 = vmul.f32 %v759, %v859
        %v881 = vmul.f32 %v764, %v859
        %v882 = vmul.f32 %v769, %v859
        %v883 = vmul.f32 %v774, %v859
        %v884 = vmul.f32 %v779, %v859
        %v885 = vmul.f32 %v784, %v859
        %v886 = vmul.f32 %v789, %v859
        %v887 = vmul.f32 %v794, %v859
        %v888 = vmul.f32 %v799, %v859
        %v889 = vmul.f32 %v804, %v859
        %v890 = vmul.f32 %v809, %v859
        %v891 = vmul.f32 %v814, %v859
        %v892 = vmul.f32 %v819, %v859
        %v893 = vmul.f32 %v824, %v859
        %v894 = vmul.f32 %v829, %v859
        %v895 = vmul.f32 %v834, %v859
        %v896 = vmul.f32 %v839, %v859
        %v897 = vmul.f32 %v844, %v859
        %v898 = vmul.f32 %v849, %v859
        %v899 = vmul.f32 %v854, %v859
        %v900 = vadd.f32 %v616, %v860
        %v901 = vadd.f32 %v617, %v861
        %v902 = vadd.f32 %v618, %v862
        %v903 = vadd.f32 %v619, %v863
        %v904 = vadd.f32 %v620, %v864
        %v905 = vadd.f32 %v621, %v865
        %v906 = vadd.f32 %v622, %v866
        %v907 = vadd.f32 %v623, %v867
        %v908 = vadd.f32 %v624, %v868
        %v909 = vadd.f32 %v625, %v869
        %v910 = vadd.f32 %v626, %v870
        %v911 = vadd.f32 %v627, %v871
        %v912 = vadd.f32 %v628, %v872
        %v913 = vadd.f32 %v629, %v873
        %v914 = vadd.f32 %v630, %v874
        %v915 = vadd.f32 %v631, %v875
        %v916 = vadd.f32 %v632, %v876
        %v917 = vadd.f32 %v633, %v877
        %v918 = vadd.f32 %v634, %v878
        %v919 = vadd.f32 %v635, %v879
        %v920 = vadd.f32 %v636, %v880
        %v921 = vadd.f32 %v637, %v881
        %v922 = vadd.f32 %v638, %v882
        %v923 = vadd.f32 %v639, %v883
        %v924 = vadd.f32 %v640, %v884
        %v925 = vadd.f32 %v641, %v885
        %v926 = vadd.f32 %v642, %v886
        %v927 = vadd.f32 %v643, %v887
        %v928 = vadd.f32 %v644, %v888
        %v929 = vadd.f32 %v645, %v889
        %v930 = vadd.f32 %v646, %v890
        %v931 = vadd.f32 %v647, %v891
        %v932 = vadd.f32 %v648, %v892
        %v933 = vadd.f32 %v649, %v893
        %v934 = vadd.f32 %v650, %v894
        %v935 = vadd.f32 %v651, %v895
        %v936 = vadd.f32 %v652, %v896
        %v937 = vadd.f32 %v653, %v897
        %v938 = vadd.f32 %v654, %v898
        %v939 = vadd.f32 %v655, %v899
        %940 = vset.pattern.permute.xlu0 1
        %941 = vperm.xlu0 %940, %v491
        %v942 = vpop.permute.xlu0 %941
        %944 = vset.pattern.permute.xlu0 1
        %945 = vperm.xlu0 %944, %v492
        %v946 = vpop.permute.xlu0 %945
        %948 = vset.pattern.permute.xlu0 1
        %949 = vperm.xlu0 %948, %v493
        %v950 = vpop.permute.xlu0 %949
        %952 = vset.pattern.permute.xlu0 1
        %953 = vperm.xlu0 %952, %v494
        %v954 = vpop.permute.xlu0 %953
        %956 = vset.pattern.permute.xlu0 1
        %957 = vperm.xlu0 %956, %v495
        %v958 = vpop.permute.xlu0 %957
        %960 = vset.pattern.permute.xlu0 1
        %961 = vperm.xlu0 %960, %v496
        %v962 = vpop.permute.xlu0 %961
        %964 = vset.pattern.permute.xlu0 1
        %965 = vperm.xlu0 %964, %v497
        %v966 = vpop.permute.xlu0 %965
        %968 = vset.pattern.permute.xlu0 1
        %969 = vperm.xlu0 %968, %v498
        %v970 = vpop.permute.xlu0 %969
        %972 = vset.pattern.permute.xlu0 1
        %973 = vperm.xlu0 %972, %v499
        %v974 = vpop.permute.xlu0 %973
        %976 = vset.pattern.permute.xlu0 1
        %977 = vperm.xlu0 %976, %v500
        %v978 = vpop.permute.xlu0 %977
        %980 = vset.pattern.permute.xlu0 1
        %981 = vperm.xlu0 %980, %v501
        %v982 = vpop.permute.xlu0 %981
        %984 = vset.pattern.permute.xlu0 1
        %985 = vperm.xlu0 %984, %v502
        %v986 = vpop.permute.xlu0 %985
        %988 = vset.pattern.permute.xlu0 1
        %989 = vperm.xlu0 %988, %v503
        %v990 = vpop.permute.xlu0 %989
        %992 = vset.pattern.permute.xlu0 1
        %993 = vperm.xlu0 %992, %v504
        %v994 = vpop.permute.xlu0 %993
        %996 = vset.pattern.permute.xlu0 1
        %997 = vperm.xlu0 %996, %v505
        %v998 = vpop.permute.xlu0 %997
        %1000 = vset.pattern.permute.xlu0 1
        %1001 = vperm.xlu0 %1000, %v506
        %v1002 = vpop.permute.xlu0 %1001
        %1004 = vset.pattern.permute.xlu0 1
        %1005 = vperm.xlu0 %1004, %v507
        %v1006 = vpop.permute.xlu0 %1005
        %1008 = vset.pattern.permute.xlu0 1
        %1009 = vperm.xlu0 %1008, %v508
        %v1010 = vpop.permute.xlu0 %1009
        %1012 = vset.pattern.permute.xlu0 1
        %1013 = vperm.xlu0 %1012, %v509
        %v1014 = vpop.permute.xlu0 %1013
        %1016 = vset.pattern.permute.xlu0 1
        %1017 = vperm.xlu0 %1016, %v510
        %v1018 = vpop.permute.xlu0 %1017
        %1020 = vset.pattern.permute.xlu0 1
        %1021 = vperm.xlu0 %1020, %v511
        %v1022 = vpop.permute.xlu0 %1021
        %1024 = vset.pattern.permute.xlu0 1
        %1025 = vperm.xlu0 %1024, %v512
        %v1026 = vpop.permute.xlu0 %1025
        %1028 = vset.pattern.permute.xlu0 1
        %1029 = vperm.xlu0 %1028, %v513
        %v1030 = vpop.permute.xlu0 %1029
        %1032 = vset.pattern.permute.xlu0 1
        %1033 = vperm.xlu0 %1032, %v514
        %v1034 = vpop.permute.xlu0 %1033
        %1036 = vset.pattern.permute.xlu0 1
        %1037 = vperm.xlu0 %1036, %v515
        %v1038 = vpop.permute.xlu0 %1037
        %1040 = vset.pattern.permute.xlu0 1
        %1041 = vperm.xlu0 %1040, %v516
        %v1042 = vpop.permute.xlu0 %1041
        %1044 = vset.pattern.permute.xlu0 1
        %1045 = vperm.xlu0 %1044, %v517
        %v1046 = vpop.permute.xlu0 %1045
        %1048 = vset.pattern.permute.xlu0 1
        %1049 = vperm.xlu0 %1048, %v518
        %v1050 = vpop.permute.xlu0 %1049
        %1052 = vset.pattern.permute.xlu0 1
        %1053 = vperm.xlu0 %1052, %v519
        %v1054 = vpop.permute.xlu0 %1053
        %1056 = vset.pattern.permute.xlu0 1
        %1057 = vperm.xlu0 %1056, %v520
        %v1058 = vpop.permute.xlu0 %1057
        %1060 = vset.pattern.permute.xlu0 1
        %1061 = vperm.xlu0 %1060, %v521
        %v1062 = vpop.permute.xlu0 %1061
        %1064 = vset.pattern.permute.xlu0 1
        %1065 = vperm.xlu0 %1064, %v522
        %v1066 = vpop.permute.xlu0 %1065
        %1068 = vset.pattern.permute.xlu0 1
        %1069 = vperm.xlu0 %1068, %v523
        %v1070 = vpop.permute.xlu0 %1069
        %1072 = vset.pattern.permute.xlu0 1
        %1073 = vperm.xlu0 %1072, %v524
        %v1074 = vpop.permute.xlu0 %1073
        %1076 = vset.pattern.permute.xlu0 1
        %1077 = vperm.xlu0 %1076, %v525
        %v1078 = vpop.permute.xlu0 %1077
        %1080 = vset.pattern.permute.xlu0 1
        %1081 = vperm.xlu0 %1080, %v526
        %v1082 = vpop.permute.xlu0 %1081
        %1084 = vset.pattern.permute.xlu0 1
        %1085 = vperm.xlu0 %1084, %v527
        %v1086 = vpop.permute.xlu0 %1085
        %1088 = vset.pattern.permute.xlu0 1
        %1089 = vperm.xlu0 %1088, %v528
        %v1090 = vpop.permute.xlu0 %1089
        %1092 = vset.pattern.permute.xlu0 1
        %1093 = vperm.xlu0 %1092, %v529
        %v1094 = vpop.permute.xlu0 %1093
        %1096 = vset.pattern.permute.xlu0 1
        %1097 = vperm.xlu0 %1096, %v530
        %v1098 = vpop.permute.xlu0 %1097
        %v1100 = vlaneseq
        %v1101 = vshrl.u32 %v1100, 7
        %v1102 = vsub.s32 1, %v1101
        %v1103 = vrot.slane %v533, %v1102
        %v1104 = vmul.f32 %v942, %v1103
        %v1105 = vmul.f32 %v946, %v1103
        %v1106 = vmul.f32 %v950, %v1103
        %v1107 = vmul.f32 %v954, %v1103
        %v1108 = vmul.f32 %v958, %v1103
        %v1109 = vmul.f32 %v962, %v1103
        %v1110 = vmul.f32 %v966, %v1103
        %v1111 = vmul.f32 %v970, %v1103
        %v1112 = vmul.f32 %v974, %v1103
        %v1113 = vmul.f32 %v978, %v1103
        %v1114 = vmul.f32 %v982, %v1103
        %v1115 = vmul.f32 %v986, %v1103
        %v1116 = vmul.f32 %v990, %v1103
        %v1117 = vmul.f32 %v994, %v1103
        %v1118 = vmul.f32 %v998, %v1103
        %v1119 = vmul.f32 %v1002, %v1103
        %v1120 = vmul.f32 %v1006, %v1103
        %v1121 = vmul.f32 %v1010, %v1103
        %v1122 = vmul.f32 %v1014, %v1103
        %v1123 = vmul.f32 %v1018, %v1103
        %v1124 = vmul.f32 %v1022, %v1103
        %v1125 = vmul.f32 %v1026, %v1103
        %v1126 = vmul.f32 %v1030, %v1103
        %v1127 = vmul.f32 %v1034, %v1103
        %v1128 = vmul.f32 %v1038, %v1103
        %v1129 = vmul.f32 %v1042, %v1103
        %v1130 = vmul.f32 %v1046, %v1103
        %v1131 = vmul.f32 %v1050, %v1103
        %v1132 = vmul.f32 %v1054, %v1103
        %v1133 = vmul.f32 %v1058, %v1103
        %v1134 = vmul.f32 %v1062, %v1103
        %v1135 = vmul.f32 %v1066, %v1103
        %v1136 = vmul.f32 %v1070, %v1103
        %v1137 = vmul.f32 %v1074, %v1103
        %v1138 = vmul.f32 %v1078, %v1103
        %v1139 = vmul.f32 %v1082, %v1103
        %v1140 = vmul.f32 %v1086, %v1103
        %v1141 = vmul.f32 %v1090, %v1103
        %v1142 = vmul.f32 %v1094, %v1103
        %v1143 = vmul.f32 %v1098, %v1103
        %v1144 = vadd.f32 %v900, %v1104
        %v1145 = vadd.f32 %v901, %v1105
        %v1146 = vadd.f32 %v902, %v1106
        %v1147 = vadd.f32 %v903, %v1107
        %v1148 = vadd.f32 %v904, %v1108
        %v1149 = vadd.f32 %v905, %v1109
        %v1150 = vadd.f32 %v906, %v1110
        %v1151 = vadd.f32 %v907, %v1111
        %v1152 = vadd.f32 %v908, %v1112
        %v1153 = vadd.f32 %v909, %v1113
        %v1154 = vadd.f32 %v910, %v1114
        %v1155 = vadd.f32 %v911, %v1115
        %v1156 = vadd.f32 %v912, %v1116
        %v1157 = vadd.f32 %v913, %v1117
        %v1158 = vadd.f32 %v914, %v1118
        %v1159 = vadd.f32 %v915, %v1119
        %v1160 = vadd.f32 %v916, %v1120
        %v1161 = vadd.f32 %v917, %v1121
        %v1162 = vadd.f32 %v918, %v1122
        %v1163 = vadd.f32 %v919, %v1123
        %v1164 = vadd.f32 %v920, %v1124
        %v1165 = vadd.f32 %v921, %v1125
        %v1166 = vadd.f32 %v922, %v1126
        %v1167 = vadd.f32 %v923, %v1127
        %v1168 = vadd.f32 %v924, %v1128
        %v1169 = vadd.f32 %v925, %v1129
        %v1170 = vadd.f32 %v926, %v1130
        %v1171 = vadd.f32 %v927, %v1131
        %v1172 = vadd.f32 %v928, %v1132
        %v1173 = vadd.f32 %v929, %v1133
        %v1174 = vadd.f32 %v930, %v1134
        %v1175 = vadd.f32 %v931, %v1135
        %v1176 = vadd.f32 %v932, %v1136
        %v1177 = vadd.f32 %v933, %v1137
        %v1178 = vadd.f32 %v934, %v1138
        %v1179 = vadd.f32 %v935, %v1139
        %v1180 = vadd.f32 %v936, %v1140
        %v1181 = vadd.f32 %v937, %v1141
        %v1182 = vadd.f32 %v938, %v1142
        %v1183 = vadd.f32 %v939, %v1143
        %v1184 = vpack.c.bf16 %v1145, %v1144
        %v1185 = vpack.c.bf16 %v1147, %v1146
        %v1186 = vpack.c.bf16 %v1149, %v1148
        %v1187 = vpack.c.bf16 %v1151, %v1150
        %v1188 = vpack.c.bf16 %v1153, %v1152
        %v1189 = vpack.c.bf16 %v1155, %v1154
        %v1190 = vpack.c.bf16 %v1157, %v1156
        %v1191 = vpack.c.bf16 %v1159, %v1158
        %v1192 = vpack.c.bf16 %v1161, %v1160
        %v1193 = vpack.c.bf16 %v1163, %v1162
        %v1194 = vpack.c.bf16 %v1165, %v1164
        %v1195 = vpack.c.bf16 %v1167, %v1166
        %v1196 = vpack.c.bf16 %v1169, %v1168
        %v1197 = vpack.c.bf16 %v1171, %v1170
        %v1198 = vpack.c.bf16 %v1173, %v1172
        %v1199 = vpack.c.bf16 %v1175, %v1174
        %v1200 = vpack.c.bf16 %v1177, %v1176
        %v1201 = vpack.c.bf16 %v1179, %v1178
        %v1202 = vpack.c.bf16 %v1181, %v1180
        %v1203 = vpack.c.bf16 %v1183, %v1182
        %s1204 = smul.u32 %s26, 16
        %s1205 = smul.addr %s1204, 4
        %s1206 = scalar_lea.vmem [#allocation3], %s1205
        %v1207 = vld [vmem:[%s1206] sm:$0xf]
        %v1208 = vld [vmem:[%s1206 + $0x4] sm:$0xf]
        %v1209 = vld [vmem:[%s1206 + $0x8] sm:$0xf]
        %v1210 = vld [vmem:[%s1206 + $0xc] sm:$0xf]
        %v1211 = vld [vmem:[%s1206 + $0x10] sm:$0xf]
        %v1212 = vld [vmem:[%s1206 + $0x14] sm:$0xf]
        %v1213 = vld [vmem:[%s1206 + $0x18] sm:$0xf]
        %v1214 = vld [vmem:[%s1206 + $0x1c] sm:$0xf]
        %v1215 = vld [vmem:[%s1206 + $0x20] sm:$0xf]
        %v1216 = vld [vmem:[%s1206 + $0x24] sm:$0xf]
        %v1217 = vld [vmem:[%s1206 + $0x28] sm:$0xf]
        %v1218 = vld [vmem:[%s1206 + $0x2c] sm:$0xf]
        %v1219 = vld [vmem:[%s1206 + $0x30] sm:$0xf]
        %v1220 = vld [vmem:[%s1206 + $0x34] sm:$0xf]
        %v1221 = vld [vmem:[%s1206 + $0x38] sm:$0xf]
        %v1222 = vld [vmem:[%s1206 + $0x3c] sm:$0xf]
        %v1224 = vlaneseq
        %v1225 = vshrl.u32 %v1224, 7
        %v1226 = vsub.s32 0, %v1225
        %v1227 = vrot.slane %v535, %v1226
        %v1245 = vunpack.c.l.b16 %v1207
        %v1246 = vunpack.c.l.b16 %v1208
        %v1247 = vunpack.c.l.b16 %v1209
        %v1248 = vunpack.c.l.b16 %v1210
        %v1249 = vunpack.c.l.b16 %v1211
        %v1250 = vunpack.c.l.b16 %v1212
        %v1251 = vunpack.c.l.b16 %v1213
        %v1252 = vunpack.c.l.b16 %v1214
        %v1253 = vunpack.c.l.b16 %v1215
        %v1254 = vunpack.c.l.b16 %v1216
        %v1255 = vunpack.c.l.b16 %v1217
        %v1256 = vunpack.c.l.b16 %v1218
        %v1257 = vunpack.c.l.b16 %v1219
        %v1258 = vunpack.c.l.b16 %v1220
        %v1259 = vunpack.c.l.b16 %v1221
        %v1260 = vunpack.c.l.b16 %v1222
        %v1261 = vpack.c.b16 %v1246, %v1245
        %v1262 = vpack.c.b16 %v1248, %v1247
        %v1263 = vpack.c.b16 %v1250, %v1249
        %v1264 = vpack.c.b16 %v1252, %v1251
        %v1265 = vpack.c.b16 %v1254, %v1253
        %v1266 = vpack.c.b16 %v1256, %v1255
        %v1267 = vpack.c.b16 %v1258, %v1257
        %v1268 = vpack.c.b16 %v1260, %v1259
        %1277 = vmatprep.subr.bf16.mxu0 0
        %1278 = vmatpush1.bf16.msra.mxu0 %v1261
        %1279 = vmatprep.subr.bf16.mxu0 0
        %1280 = vmatpush1.bf16.msra.mxu0 %v1262
        %1281 = vmatprep.subr.bf16.mxu0 0
        %1282 = vmatpush1.bf16.msra.mxu0 %v1263
        %1283 = vmatprep.subr.bf16.mxu0 0
        %1284 = vmatpush1.bf16.msra.mxu0 %v1264
        %1285 = vmatprep.subr.bf16.mxu0 0
        %1286 = vmatpush1.bf16.msra.mxu0 %v1265
        %1287 = vmatprep.subr.bf16.mxu0 0
        %1288 = vmatpush1.bf16.msra.mxu0 %v1266
        %1289 = vmatprep.subr.bf16.mxu0 0
        %1290 = vmatpush1.bf16.msra.mxu0 %v1267
        %1291 = vmatprep.subr.bf16.mxu0 0
        %1292 = vmatpush1.bf16.msra.mxu0 %v1268
        %1293 = vmatprep.subr.bf16.mxu0 0
        %1294 = vmatpush1.bf16.msra.mxu0 0
        %1295 = vmatprep.subr.bf16.mxu0 0
        %1296 = vmatpush1.bf16.msra.mxu0 0
        %1297 = vmatprep.subr.bf16.mxu0 0
        %1298 = vmatpush1.bf16.msra.mxu0 0
        %1299 = vmatprep.subr.bf16.mxu0 0
        %1300 = vmatpush1.bf16.msra.mxu0 0
        %1301 = vmatprep.subr.bf16.mxu0 0
        %1302 = vmatpush1.bf16.msra.mxu0 0
        %1303 = vmatprep.subr.bf16.mxu0 0
        %1304 = vmatpush1.bf16.msra.mxu0 0
        %1305 = vmatprep.subr.bf16.mxu0 0
        %1306 = vmatpush1.bf16.msra.mxu0 0
        %1307 = vmatprep.subr.bf16.mxu0 0
        %1308 = vmatpush1.bf16.msra.mxu0 0
        %1309 = vmatprep.mubr.bf16.mxu0 0
        %1310 = vmatmul.mubr.bf16.gmra.mrb[0].mxu0 %v1184
        %v1311 = vpop.f32.mrb[0].mxu0
        %v1312 = vadd.f32 %v1227, %v1311
        %v1313 = vpop.f32.mrb[0].mxu0
        %v1314 = vpop.f32.mrb[0].mxu0
        %v1315 = vadd.f32 %v1227, %v1314
        %v1316 = vpop.f32.mrb[0].mxu0
        %1317 = vmatprep.mubr.bf16.mxu0 0
        %1318 = vmatmul.mubr.bf16.gmra.mrb[0].mxu0 %v1185
        %v1319 = vpop.f32.mrb[0].mxu0
        %v1320 = vadd.f32 %v1227, %v1319
        %v1321 = vpop.f32.mrb[0].mxu0
        %v1322 = vpop.f32.mrb[0].mxu0
        %v1323 = vadd.f32 %v1227, %v1322
        %v1324 = vpop.f32.mrb[0].mxu0
        %1325 = vmatprep.mubr.bf16.mxu0 0
        %1326 = vmatmul.mubr.bf16.gmra.mrb[0].mxu0 %v1186
        %v1327 = vpop.f32.mrb[0].mxu0
        %v1328 = vadd.f32 %v1227, %v1327
        %v1329 = vpop.f32.mrb[0].mxu0
        %v1330 = vpop.f32.mrb[0].mxu0
        %v1331 = vadd.f32 %v1227, %v1330
        %v1332 = vpop.f32.mrb[0].mxu0
        %1333 = vmatprep.mubr.bf16.mxu0 0
        %1334 = vmatmul.mubr.bf16.gmra.mrb[0].mxu0 %v1187
        %v1335 = vpop.f32.mrb[0].mxu0
        %v1336 = vadd.f32 %v1227, %v1335
        %v1337 = vpop.f32.mrb[0].mxu0
        %v1338 = vpop.f32.mrb[0].mxu0
        %v1339 = vadd.f32 %v1227, %v1338
        %v1340 = vpop.f32.mrb[0].mxu0
        %1341 = vmatprep.mubr.bf16.mxu0 0
        %1342 = vmatmul.mubr.bf16.gmra.mrb[0].mxu0 %v1188
        %v1343 = vpop.f32.mrb[0].mxu0
        %v1344 = vadd.f32 %v1227, %v1343
        %v1345 = vpop.f32.mrb[0].mxu0
        %v1346 = vpop.f32.mrb[0].mxu0
        %v1347 = vadd.f32 %v1227, %v1346
        %v1348 = vpop.f32.mrb[0].mxu0
        %1349 = vmatprep.mubr.bf16.mxu0 0
        %1350 = vmatmul.mubr.bf16.gmra.mrb[0].mxu0 %v1189
        %v1351 = vpop.f32.mrb[0].mxu0
        %v1352 = vadd.f32 %v1227, %v1351
        %v1353 = vpop.f32.mrb[0].mxu0
        %v1354 = vpop.f32.mrb[0].mxu0
        %v1355 = vadd.f32 %v1227, %v1354
        %v1356 = vpop.f32.mrb[0].mxu0
        %1357 = vmatprep.mubr.bf16.mxu0 0
        %1358 = vmatmul.mubr.bf16.gmra.mrb[0].mxu0 %v1190
        %v1359 = vpop.f32.mrb[0].mxu0
        %v1360 = vadd.f32 %v1227, %v1359
        %v1361 = vpop.f32.mrb[0].mxu0
        %v1362 = vpop.f32.mrb[0].mxu0
        %v1363 = vadd.f32 %v1227, %v1362
        %v1364 = vpop.f32.mrb[0].mxu0
        %1365 = vmatprep.mubr.bf16.mxu0 0
        %1366 = vmatmul.mubr.bf16.gmra.mrb[0].mxu0 %v1191
        %v1367 = vpop.f32.mrb[0].mxu0
        %v1368 = vadd.f32 %v1227, %v1367
        %v1369 = vpop.f32.mrb[0].mxu0
        %v1370 = vpop.f32.mrb[0].mxu0
        %v1371 = vadd.f32 %v1227, %v1370
        %v1372 = vpop.f32.mrb[0].mxu0
        %1373 = vmatprep.mubr.bf16.mxu0 0
        %1374 = vmatmul.mubr.bf16.gmra.mrb[0].mxu0 %v1192
        %v1375 = vpop.f32.mrb[0].mxu0
        %v1376 = vadd.f32 %v1227, %v1375
        %v1377 = vpop.f32.mrb[0].mxu0
        %v1378 = vpop.f32.mrb[0].mxu0
        %v1379 = vadd.f32 %v1227, %v1378
        %v1380 = vpop.f32.mrb[0].mxu0
        %1381 = vmatprep.mubr.bf16.mxu0 0
        %1382 = vmatmul.mubr.bf16.gmra.mrb[0].mxu0 %v1193
        %v1383 = vpop.f32.mrb[0].mxu0
        %v1384 = vadd.f32 %v1227, %v1383
        %v1385 = vpop.f32.mrb[0].mxu0
        %v1386 = vpop.f32.mrb[0].mxu0
        %v1387 = vadd.f32 %v1227, %v1386
        %v1388 = vpop.f32.mrb[0].mxu0
        %1389 = vmatprep.mubr.bf16.mxu0 0
        %1390 = vmatmul.mubr.bf16.gmra.mrb[0].mxu0 %v1194
        %v1391 = vpop.f32.mrb[0].mxu0
        %v1392 = vadd.f32 %v1227, %v1391
        %v1393 = vpop.f32.mrb[0].mxu0
        %v1394 = vpop.f32.mrb[0].mxu0
        %v1395 = vadd.f32 %v1227, %v1394
        %v1396 = vpop.f32.mrb[0].mxu0
        %1397 = vmatprep.mubr.bf16.mxu0 0
        %1398 = vmatmul.mubr.bf16.gmra.mrb[0].mxu0 %v1195
        %v1399 = vpop.f32.mrb[0].mxu0
        %v1400 = vadd.f32 %v1227, %v1399
        %v1401 = vpop.f32.mrb[0].mxu0
        %v1402 = vpop.f32.mrb[0].mxu0
        %v1403 = vadd.f32 %v1227, %v1402
        %v1404 = vpop.f32.mrb[0].mxu0
        %1405 = vmatprep.mubr.bf16.mxu0 0
        %1406 = vmatmul.mubr.bf16.gmra.mrb[0].mxu0 %v1196
        %v1407 = vpop.f32.mrb[0].mxu0
        %v1408 = vadd.f32 %v1227, %v1407
        %v1409 = vpop.f32.mrb[0].mxu0
        %v1410 = vpop.f32.mrb[0].mxu0
        %v1411 = vadd.f32 %v1227, %v1410
        %v1412 = vpop.f32.mrb[0].mxu0
        %1413 = vmatprep.mubr.bf16.mxu0 0
        %1414 = vmatmul.mubr.bf16.gmra.mrb[0].mxu0 %v1197
        %v1415 = vpop.f32.mrb[0].mxu0
        %v1416 = vadd.f32 %v1227, %v1415
        %v1417 = vpop.f32.mrb[0].mxu0
        %v1418 = vpop.f32.mrb[0].mxu0
        %v1419 = vadd.f32 %v1227, %v1418
        %v1420 = vpop.f32.mrb[0].mxu0
        %1421 = vmatprep.mubr.bf16.mxu0 0
        %1422 = vmatmul.mubr.bf16.gmra.mrb[0].mxu0 %v1198
        %v1423 = vpop.f32.mrb[0].mxu0
        %v1424 = vadd.f32 %v1227, %v1423
        %v1425 = vpop.f32.mrb[0].mxu0
        %v1426 = vpop.f32.mrb[0].mxu0
        %v1427 = vadd.f32 %v1227, %v1426
        %v1428 = vpop.f32.mrb[0].mxu0
        %1429 = vmatprep.mubr.bf16.mxu0 0
        %1430 = vmatmul.mubr.bf16.gmra.mrb[0].mxu0 %v1199
        %v1431 = vpop.f32.mrb[0].mxu0
        %v1432 = vadd.f32 %v1227, %v1431
        %v1433 = vpop.f32.mrb[0].mxu0
        %v1434 = vpop.f32.mrb[0].mxu0
        %v1435 = vadd.f32 %v1227, %v1434
        %v1436 = vpop.f32.mrb[0].mxu0
        %1437 = vmatprep.mubr.bf16.mxu0 0
        %1438 = vmatmul.mubr.bf16.gmra.mrb[0].mxu0 %v1200
        %v1439 = vpop.f32.mrb[0].mxu0
        %v1440 = vadd.f32 %v1227, %v1439
        %v1441 = vpop.f32.mrb[0].mxu0
        %v1442 = vpop.f32.mrb[0].mxu0
        %v1443 = vadd.f32 %v1227, %v1442
        %v1444 = vpop.f32.mrb[0].mxu0
        %1445 = vmatprep.mubr.bf16.mxu0 0
        %1446 = vmatmul.mubr.bf16.gmra.mrb[0].mxu0 %v1201
        %v1447 = vpop.f32.mrb[0].mxu0
        %v1448 = vadd.f32 %v1227, %v1447
        %v1449 = vpop.f32.mrb[0].mxu0
        %v1450 = vpop.f32.mrb[0].mxu0
        %v1451 = vadd.f32 %v1227, %v1450
        %v1452 = vpop.f32.mrb[0].mxu0
        %1453 = vmatprep.mubr.bf16.mxu0 0
        %1454 = vmatmul.mubr.bf16.gmra.mrb[0].mxu0 %v1202
        %v1455 = vpop.f32.mrb[0].mxu0
        %v1456 = vadd.f32 %v1227, %v1455
        %v1457 = vpop.f32.mrb[0].mxu0
        %v1458 = vpop.f32.mrb[0].mxu0
        %v1459 = vadd.f32 %v1227, %v1458
        %v1460 = vpop.f32.mrb[0].mxu0
        %1461 = vmatprep.mubr.bf16.mxu0 0
        %1462 = vmatmul.mubr.bf16.gmra.mrb[0].mxu0 %v1203
        %v1463 = vpop.f32.mrb[0].mxu0
        %v1464 = vadd.f32 %v1227, %v1463
        %v1465 = vpop.f32.mrb[0].mxu0
        %v1466 = vpop.f32.mrb[0].mxu0
        %v1467 = vadd.f32 %v1227, %v1466
        %v1468 = vpop.f32.mrb[0].mxu0
        %1469 = vdwg.mxu0
        %v1470 = vmax.f32 %v1312, 0.0
        %v1471 = vmax.f32 %v1315, 0.0
        %v1472 = vmax.f32 %v1320, 0.0
        %v1473 = vmax.f32 %v1323, 0.0
        %v1474 = vmax.f32 %v1328, 0.0
        %v1475 = vmax.f32 %v1331, 0.0
        %v1476 = vmax.f32 %v1336, 0.0
        %v1477 = vmax.f32 %v1339, 0.0
        %v1478 = vmax.f32 %v1344, 0.0
        %v1479 = vmax.f32 %v1347, 0.0
        %v1480 = vmax.f32 %v1352, 0.0
        %v1481 = vmax.f32 %v1355, 0.0
        %v1482 = vmax.f32 %v1360, 0.0
        %v1483 = vmax.f32 %v1363, 0.0
        %v1484 = vmax.f32 %v1368, 0.0
        %v1485 = vmax.f32 %v1371, 0.0
        %v1486 = vmax.f32 %v1376, 0.0
        %v1487 = vmax.f32 %v1379, 0.0
        %v1488 = vmax.f32 %v1384, 0.0
        %v1489 = vmax.f32 %v1387, 0.0
        %v1490 = vmax.f32 %v1392, 0.0
        %v1491 = vmax.f32 %v1395, 0.0
        %v1492 = vmax.f32 %v1400, 0.0
        %v1493 = vmax.f32 %v1403, 0.0
        %v1494 = vmax.f32 %v1408, 0.0
        %v1495 = vmax.f32 %v1411, 0.0
        %v1496 = vmax.f32 %v1416, 0.0
        %v1497 = vmax.f32 %v1419, 0.0
        %v1498 = vmax.f32 %v1424, 0.0
        %v1499 = vmax.f32 %v1427, 0.0
        %v1500 = vmax.f32 %v1432, 0.0
        %v1501 = vmax.f32 %v1435, 0.0
        %v1502 = vmax.f32 %v1440, 0.0
        %v1503 = vmax.f32 %v1443, 0.0
        %v1504 = vmax.f32 %v1448, 0.0
        %v1505 = vmax.f32 %v1451, 0.0
        %v1506 = vmax.f32 %v1456, 0.0
        %v1507 = vmax.f32 %v1459, 0.0
        %v1508 = vmax.f32 %v1464, 0.0
        %v1509 = vmax.f32 %v1467, 0.0
        %v1510 = vadd.f32 %v451, %v1470
        %v1511 = vadd.f32 %v452, %v1471
        %v1512 = vadd.f32 %v453, %v1472
        %v1513 = vadd.f32 %v454, %v1473
        %v1514 = vadd.f32 %v455, %v1474
        %v1515 = vadd.f32 %v456, %v1475
        %v1516 = vadd.f32 %v457, %v1476
        %v1517 = vadd.f32 %v458, %v1477
        %v1518 = vadd.f32 %v459, %v1478
        %v1519 = vadd.f32 %v460, %v1479
        %v1520 = vadd.f32 %v461, %v1480
        %v1521 = vadd.f32 %v462, %v1481
        %v1522 = vadd.f32 %v463, %v1482
        %v1523 = vadd.f32 %v464, %v1483
        %v1524 = vadd.f32 %v465, %v1484
        %v1525 = vadd.f32 %v466, %v1485
        %v1526 = vadd.f32 %v467, %v1486
        %v1527 = vadd.f32 %v468, %v1487
        %v1528 = vadd.f32 %v469, %v1488
        %v1529 = vadd.f32 %v470, %v1489
        %v1530 = vadd.f32 %v471, %v1490
        %v1531 = vadd.f32 %v472, %v1491
        %v1532 = vadd.f32 %v473, %v1492
        %v1533 = vadd.f32 %v474, %v1493
        %v1534 = vadd.f32 %v475, %v1494
        %v1535 = vadd.f32 %v476, %v1495
        %v1536 = vadd.f32 %v477, %v1496
        %v1537 = vadd.f32 %v478, %v1497
        %v1538 = vadd.f32 %v479, %v1498
        %v1539 = vadd.f32 %v480, %v1499
        %v1540 = vadd.f32 %v481, %v1500
        %v1541 = vadd.f32 %v482, %v1501
        %v1542 = vadd.f32 %v483, %v1502
        %v1543 = vadd.f32 %v484, %v1503
        %v1544 = vadd.f32 %v485, %v1504
        %v1545 = vadd.f32 %v486, %v1505
        %v1546 = vadd.f32 %v487, %v1506
        %v1547 = vadd.f32 %v488, %v1507
        %v1548 = vadd.f32 %v489, %v1508
        %v1549 = vadd.f32 %v490, %v1509
        %1550 = vst [vmem:[#allocation2] sm:$0xff] %v1510
        %1551 = vst [vmem:[#allocation2 + $0x8] sm:$0xff] %v1511
        %1552 = vst [vmem:[#allocation2 + $0x10] sm:$0xff] %v1512
        %1553 = vst [vmem:[#allocation2 + $0x18] sm:$0xff] %v1513
        %1554 = vst [vmem:[#allocation2 + $0x20] sm:$0xff] %v1514
        %1555 = vst [vmem:[#allocation2 + $0x28] sm:$0xff] %v1515
        %1556 = vst [vmem:[#allocation2 + $0x30] sm:$0xff] %v1516
        %1557 = vst [vmem:[#allocation2 + $0x38] sm:$0xff] %v1517
        %1558 = vst [vmem:[#allocation2 + $0x40] sm:$0xff] %v1518
        %1559 = vst [vmem:[#allocation2 + $0x48] sm:$0xff] %v1519
        %1560 = vst [vmem:[#allocation2 + $0x50] sm:$0xff] %v1520
        %1561 = vst [vmem:[#allocation2 + $0x58] sm:$0xff] %v1521
        %1562 = vst [vmem:[#allocation2 + $0x60] sm:$0xff] %v1522
        %1563 = vst [vmem:[#allocation2 + $0x68] sm:$0xff] %v1523
        %1564 = vst [vmem:[#allocation2 + $0x70] sm:$0xff] %v1524
        %1565 = vst [vmem:[#allocation2 + $0x78] sm:$0xff] %v1525
        %1566 = vst [vmem:[#allocation2 + $0x80] sm:$0xff] %v1526
        %1567 = vst [vmem:[#allocation2 + $0x88] sm:$0xff] %v1527
        %1568 = vst [vmem:[#allocation2 + $0x90] sm:$0xff] %v1528
        %1569 = vst [vmem:[#allocation2 + $0x98] sm:$0xff] %v1529
        %1570 = vst [vmem:[#allocation2 + $0xa0] sm:$0xff] %v1530
        %1571 = vst [vmem:[#allocation2 + $0xa8] sm:$0xff] %v1531
        %1572 = vst [vmem:[#allocation2 + $0xb0] sm:$0xff] %v1532
        %1573 = vst [vmem:[#allocation2 + $0xb8] sm:$0xff] %v1533
        %1574 = vst [vmem:[#allocation2 + $0xc0] sm:$0xff] %v1534
        %1575 = vst [vmem:[#allocation2 + $0xc8] sm:$0xff] %v1535
        %1576 = vst [vmem:[#allocation2 + $0xd0] sm:$0xff] %v1536
        %1577 = vst [vmem:[#allocation2 + $0xd8] sm:$0xff] %v1537
        %1578 = vst [vmem:[#allocation2 + $0xe0] sm:$0xff] %v1538
        %1579 = vst [vmem:[#allocation2 + $0xe8] sm:$0xff] %v1539
        %1580 = vst [vmem:[#allocation2 + $0xf0] sm:$0xff] %v1540
        %1581 = vst [vmem:[#allocation2 + $0xf8] sm:$0xff] %v1541
        %1582 = vst [vmem:[#allocation2 + $0x100] sm:$0xff] %v1542
        %1583 = vst [vmem:[#allocation2 + $0x108] sm:$0xff] %v1543
        %1584 = vst [vmem:[#allocation2 + $0x110] sm:$0xff] %v1544
        %1585 = vst [vmem:[#allocation2 + $0x118] sm:$0xff] %v1545
        %1586 = vst [vmem:[#allocation2 + $0x120] sm:$0xff] %v1546
        %1587 = vst [vmem:[#allocation2 + $0x128] sm:$0xff] %v1547
        %1588 = vst [vmem:[#allocation2 + $0x130] sm:$0xff] %v1548
        %1589 = vst [vmem:[#allocation2 + $0x138] sm:$0xff] %v1549
        %v1590 = vpack.c.bf16 %v1511, %v1510
        %v1591 = vpack.c.bf16 %v1513, %v1512
        %v1592 = vpack.c.bf16 %v1515, %v1514
        %v1593 = vpack.c.bf16 %v1517, %v1516
        %v1594 = vpack.c.bf16 %v1519, %v1518
        %v1595 = vpack.c.bf16 %v1521, %v1520
        %v1596 = vpack.c.bf16 %v1523, %v1522
        %v1597 = vpack.c.bf16 %v1525, %v1524
        %v1598 = vpack.c.bf16 %v1527, %v1526
        %v1599 = vpack.c.bf16 %v1529, %v1528
        %v1600 = vpack.c.bf16 %v1531, %v1530
        %v1601 = vpack.c.bf16 %v1533, %v1532
        %v1602 = vpack.c.bf16 %v1535, %v1534
        %v1603 = vpack.c.bf16 %v1537, %v1536
        %v1604 = vpack.c.bf16 %v1539, %v1538
        %v1605 = vpack.c.bf16 %v1541, %v1540
        %v1606 = vpack.c.bf16 %v1543, %v1542
        %v1607 = vpack.c.bf16 %v1545, %v1544
        %v1608 = vpack.c.bf16 %v1547, %v1546
        %v1609 = vpack.c.bf16 %v1549, %v1548
        %v1630 = vunpack.c.l.b16 %v1590
        %v1631 = vunpack.c.h.b16 %v1590
        %v1632 = vunpack.c.l.b16 %v1591
        %v1633 = vunpack.c.h.b16 %v1591
        %v1634 = vunpack.c.l.b16 %v1592
        %v1635 = vunpack.c.h.b16 %v1592
        %v1636 = vunpack.c.l.b16 %v1593
        %v1637 = vunpack.c.h.b16 %v1593
        %v1638 = vunpack.c.l.b16 %v1594
        %v1639 = vunpack.c.h.b16 %v1594
        %v1640 = vunpack.c.l.b16 %v1595
        %v1641 = vunpack.c.h.b16 %v1595
        %v1642 = vunpack.c.l.b16 %v1596
        %v1643 = vunpack.c.h.b16 %v1596
        %v1644 = vunpack.c.l.b16 %v1597
        %v1645 = vunpack.c.h.b16 %v1597
        %v1646 = vunpack.c.l.b16 %v1598
        %v1647 = vunpack.c.h.b16 %v1598
        %v1648 = vunpack.c.l.b16 %v1599
        %v1649 = vunpack.c.h.b16 %v1599
        %v1650 = vunpack.c.l.b16 %v1600
        %v1651 = vunpack.c.h.b16 %v1600
        %v1652 = vunpack.c.l.b16 %v1601
        %v1653 = vunpack.c.h.b16 %v1601
        %v1654 = vunpack.c.l.b16 %v1602
        %v1655 = vunpack.c.h.b16 %v1602
        %v1656 = vunpack.c.l.b16 %v1603
        %v1657 = vunpack.c.h.b16 %v1603
        %v1658 = vunpack.c.l.b16 %v1604
        %v1659 = vunpack.c.h.b16 %v1604
        %v1660 = vunpack.c.l.b16 %v1605
        %v1661 = vunpack.c.h.b16 %v1605
        %v1662 = vunpack.c.l.b16 %v1606
        %v1663 = vunpack.c.h.b16 %v1606
        %v1664 = vunpack.c.l.b16 %v1607
        %v1665 = vunpack.c.h.b16 %v1607
        %v1666 = vunpack.c.l.b16 %v1608
        %v1667 = vunpack.c.h.b16 %v1608
        %v1668 = vunpack.c.l.b16 %v1609
        %v1669 = vunpack.c.h.b16 %v1609
        %v1670 = vpack.c.b16 %v1630, %v1630
        %v1671 = vpack.c.b16 %v1631, %v1631
        %v1672 = vpack.c.b16 %v1632, %v1632
        %v1673 = vpack.c.b16 %v1633, %v1633
        %v1674 = vpack.c.b16 %v1634, %v1634
        %v1675 = vpack.c.b16 %v1635, %v1635
        %v1676 = vpack.c.b16 %v1636, %v1636
        %v1677 = vpack.c.b16 %v1637, %v1637
        %v1678 = vpack.c.b16 %v1638, %v1638
        %v1679 = vpack.c.b16 %v1639, %v1639
        %v1680 = vpack.c.b16 %v1640, %v1640
        %v1681 = vpack.c.b16 %v1641, %v1641
        %v1682 = vpack.c.b16 %v1642, %v1642
        %v1683 = vpack.c.b16 %v1643, %v1643
        %v1684 = vpack.c.b16 %v1644, %v1644
        %v1685 = vpack.c.b16 %v1645, %v1645
        %v1686 = vpack.c.b16 %v1646, %v1646
        %v1687 = vpack.c.b16 %v1647, %v1647
        %v1688 = vpack.c.b16 %v1648, %v1648
        %v1689 = vpack.c.b16 %v1649, %v1649
        %v1690 = vpack.c.b16 %v1650, %v1650
        %v1691 = vpack.c.b16 %v1651, %v1651
        %v1692 = vpack.c.b16 %v1652, %v1652
        %v1693 = vpack.c.b16 %v1653, %v1653
        %v1694 = vpack.c.b16 %v1654, %v1654
        %v1695 = vpack.c.b16 %v1655, %v1655
        %v1696 = vpack.c.b16 %v1656, %v1656
        %v1697 = vpack.c.b16 %v1657, %v1657
        %v1698 = vpack.c.b16 %v1658, %v1658
        %v1699 = vpack.c.b16 %v1659, %v1659
        %v1700 = vpack.c.b16 %v1660, %v1660
        %v1701 = vpack.c.b16 %v1661, %v1661
        %v1702 = vpack.c.b16 %v1662, %v1662
        %v1703 = vpack.c.b16 %v1663, %v1663
        %v1704 = vpack.c.b16 %v1664, %v1664
        %v1705 = vpack.c.b16 %v1665, %v1665
        %v1706 = vpack.c.b16 %v1666, %v1666
        %v1707 = vpack.c.b16 %v1667, %v1667
        %v1708 = vpack.c.b16 %v1668, %v1668
        %v1709 = vpack.c.b16 %v1669, %v1669
        %1750 = vst [vmem:[%s306] sm:$0xf] %v1670
        %1751 = vst [vmem:[%s306 + $0x4] sm:$0xf] %v1671
        %1752 = vst [vmem:[%s306 + $0x8] sm:$0xf] %v1672
        %1753 = vst [vmem:[%s306 + $0xc] sm:$0xf] %v1673
        %1754 = vst [vmem:[%s306 + $0x10] sm:$0xf] %v1674
        %1755 = vst [vmem:[%s306 + $0x14] sm:$0xf] %v1675
        %1756 = vst [vmem:[%s306 + $0x18] sm:$0xf] %v1676
        %1757 = vst [vmem:[%s306 + $0x1c] sm:$0xf] %v1677
        %1758 = vst [vmem:[%s306 + $0x20] sm:$0xf] %v1678
        %1759 = vst [vmem:[%s306 + $0x24] sm:$0xf] %v1679
        %1760 = vst [vmem:[%s306 + $0x28] sm:$0xf] %v1680
        %1761 = vst [vmem:[%s306 + $0x2c] sm:$0xf] %v1681
        %1762 = vst [vmem:[%s306 + $0x30] sm:$0xf] %v1682
        %1763 = vst [vmem:[%s306 + $0x34] sm:$0xf] %v1683
        %1764 = vst [vmem:[%s306 + $0x38] sm:$0xf] %v1684
        %1765 = vst [vmem:[%s306 + $0x3c] sm:$0xf] %v1685
        %1766 = vst [vmem:[%s306 + $0x40] sm:$0xf] %v1686
        %1767 = vst [vmem:[%s306 + $0x44] sm:$0xf] %v1687
        %1768 = vst [vmem:[%s306 + $0x48] sm:$0xf] %v1688
        %1769 = vst [vmem:[%s306 + $0x4c] sm:$0xf] %v1689
        %1770 = vst [vmem:[%s306 + $0x50] sm:$0xf] %v1690
        %1771 = vst [vmem:[%s306 + $0x54] sm:$0xf] %v1691
        %1772 = vst [vmem:[%s306 + $0x58] sm:$0xf] %v1692
        %1773 = vst [vmem:[%s306 + $0x5c] sm:$0xf] %v1693
        %1774 = vst [vmem:[%s306 + $0x60] sm:$0xf] %v1694
        %1775 = vst [vmem:[%s306 + $0x64] sm:$0xf] %v1695
        %1776 = vst [vmem:[%s306 + $0x68] sm:$0xf] %v1696
        %1777 = vst [vmem:[%s306 + $0x6c] sm:$0xf] %v1697
        %1778 = vst [vmem:[%s306 + $0x70] sm:$0xf] %v1698
        %1779 = vst [vmem:[%s306 + $0x74] sm:$0xf] %v1699
        %1780 = vst [vmem:[%s306 + $0x78] sm:$0xf] %v1700
        %1781 = vst [vmem:[%s306 + $0x7c] sm:$0xf] %v1701
        %1782 = vst [vmem:[%s306 + $0x80] sm:$0xf] %v1702
        %1783 = vst [vmem:[%s306 + $0x84] sm:$0xf] %v1703
        %1784 = vst [vmem:[%s306 + $0x88] sm:$0xf] %v1704
        %1785 = vst [vmem:[%s306 + $0x8c] sm:$0xf] %v1705
        %1786 = vst [vmem:[%s306 + $0x90] sm:$0xf] %v1706
        %1787 = vst [vmem:[%s306 + $0x94] sm:$0xf] %v1707
        %1788 = vst [vmem:[%s306 + $0x98] sm:$0xf] %v1708
        %1789 = vst [vmem:[%s306 + $0x9c] sm:$0xf] %v1709
        %s1790 = sand.u32 %s184, 1
        %s1791 = scalar_lea.sflag [#allocation5], %s1790
        %s1792 = sand.u32 %s184, 1
        %s1793 = smul.addr %s1792, 160
        %s1794 = scalar_lea.vmem [#allocation6], %s1793
        // Predicated region
        $region53: #{tpu_custom_call.1} parent=43 // pred_check
          %p1795 = pneg %p194
        $region54: #{tpu_custom_call.1} parent=43 // pred_check_branch
          %1797 = sbr.rel (%p1795) target = $region56
        $region55: #{tpu_custom_call.1} parent=43 // pred_region
          %s1798 = smul.u32 40, %s25
          %s1800 = ssub.s32 2560, 2560
          %1801 = vsyncadd %s1791, %s1800
          %s1802 = smul.addr %s26, 80
          %s1803 = sadd.s32 %s1798, %s1802
          %s1804 = smul.addr %s1803, 64
          %s1805 = scalar_lea.hbm %s6, %s1804
          %s1806 = sshll.u32 %s1794, 4
          %s1807 = int_to_ptr.vmem [resolvable:$true] %s1806
          %1812 = dma.vmem_to_hbm [thread:$0]  %s1807, 2560, %s1805, %s1791, 64, 64, 4
        $region56: #{tpu_custom_call.1} parent=43 // pred_fallthru
          _
      $region44: #{tpu_custom_call.1} parent=5 // pred_fallthru
        _
      %p1813 = scmp.le.s32.totalorder 2, %s16
      // Predicated region
      $region57: #{tpu_custom_call.1} parent=5 // pred_check
        %p1814 = pneg %p1813
      $region58: #{tpu_custom_call.1} parent=5 // pred_check_branch
        %1816 = sbr.rel (%p1814) target = $region60
      $region59: #{tpu_custom_call.1} parent=5 // pred_region
        %s1817 = ssub.s32 %s16, 2
        // Predicated region
        $region61: #{tpu_custom_call.1} parent=59 // pred_check
          %p1818 = pneg %p200
        $region62: #{tpu_custom_call.1} parent=59 // pred_check_branch
          %1820 = sbr.rel (%p1818) target = $region64
        $region63: #{tpu_custom_call.1} parent=59 // pred_region
          %s1821 = sand.u32 %s185, 1
          %s1822 = scalar_lea.sflag [#allocation5], %s1821
          %s1823 = sand.u32 %s185, 1
          %s1824 = smul.addr %s1823, 160
          %s1825 = scalar_lea.vmem [#allocation6], %s1824
          %1826 = dma.done %s1822, 2560
        $region64: #{tpu_custom_call.1} parent=59 // pred_fallthru
          _
      $region60: #{tpu_custom_call.1} parent=5 // pred_fallthru
        _
    $region6: #{tpu_custom_call.1} parent=1 // loop_footer
      %s20 = sadd.s32 1, %s16
    $region7: #{tpu_custom_call.1} parent=1 // loop_footer_branch
      %15 = sbr.rel target = $region3
    $region8: #{tpu_custom_call.1} parent=1 // loop_exit
      _
    %1827 = vsyncpa [#allocation4], 1
    %s1828 = scalar_lea.sflag [#allocation4], 1
    %1829 = vsyncpa %s1828, 1
    %1830 = vsyncpa [#allocation5], 1
    %s1831 = scalar_lea.sflag [#allocation5], 1
    %1832 = vsyncpa %s1831, 1

</llo_original>
